<compile_context>
chip_gen: v6e
topology: v6e:2x2x1
jax: 0.10.0
libtpu: 0.0.40
codegen_flags: <defaults>
</compile_context>

<pallas_src>
import jax
import jax.numpy as jnp
from jax.experimental import pallas as pl
from jax.experimental.pallas import tpu as pltpu

HIDDEN = 30          # true hidden size (matches the PyTorch module)
HP = 32              # padded hidden size (f32 lane friendly)
NUM_LAYERS = 2


def rnn_linear_kernel(x_ref,        # (B, T)        input (input_size == 1 squeezed)
                      h_ref,        # (2, B, 30)    initial hidden (unpadded)
                      wih0_t_ref,   # (1, HP)       W_ih_l0^T
                      whh0_t_ref,   # (HP, HP)      W_hh_l0^T
                      b0_ref,       # (1, HP)       b_ih_l0 + b_hh_l0
                      wih1_t_ref,   # (HP, HP)      W_ih_l1^T
                      whh1_t_ref,   # (HP, HP)      W_hh_l1^T
                      b1_ref,       # (1, HP)       b_ih_l1 + b_hh_l1
                      wlin_ref,     # (1, HP)       Linear weight
                      blin_ref,     # (1, 1)        Linear bias
                      out_ref,      # (B, T)        per-step scalar outputs
                      hout_ref,     # (2, B, 30)    final hidden
                      h0_scr,       # (B, T, HP)    scratch: h0 seq, then xw1 seq
                      h1_scr):      # (B, T, HP)    scratch: h1 seq
    """Whole-sequence 2-layer tanh RNN + Linear(30,1), fully VMEM-resident."""
    B, T = x_ref.shape

    whh0_t = whh0_t_ref[...]
    whh1_t = whh1_t_ref[...]

    # Pad the incoming hidden state 30 -> 32 lanes in-kernel.  Padded lanes
    # are zero and stay zero through both layers (padded weight rows/cols and
    # biases are zero, tanh(0) == 0), so results are exact.
    zpad = jnp.zeros((B, HP - HIDDEN), jnp.float32)
    h0 = jnp.concatenate([h_ref[0], zpad], axis=-1)            # (B, HP)
    h1 = jnp.concatenate([h_ref[1], zpad], axis=-1)            # (B, HP)

    # Layer-0 input contribution (+ fused layer-0 bias) for ALL timesteps,
    # one broadcast pass off the recurrence chain.
    xw0_all = x_ref[...][:, :, None] * wih0_t_ref[...] + b0_ref[...]  # (B,T,HP)

    # ---- phase 1: layer-0 recurrence (matmul + tanh only on the chain) ----
    # T == 8 -> keep Python-unrolled.
    for t in range(T):
        pre0 = xw0_all[:, t, :] + jnp.dot(h0, whh0_t,
                                          preferred_element_type=jnp.float32)
        h0 = jnp.tanh(pre0)                                    # (B, HP)
        h0_scr[:, t, :] = h0

    # ---- phase 2: layer-1 input projection for the whole sequence as ONE
    # batched MXU pass (b1 folded in here), off the recurrence chain. ----
    h0_all = h0_scr[...].reshape(B * T, HP)
    xw1 = jnp.dot(h0_all, wih1_t_ref[...],
                  preferred_element_type=jnp.float32) + b1_ref[...]
    h0_scr[...] = xw1.reshape(B, T, HP)       # reuse scratch; h0 carry kept

    # ---- phase 3: layer-1 recurrence (only h1 @ whh1_t + tanh per step) ----
    for t in range(T):
        pre1 = h0_scr[:, t, :] + jnp.dot(h1, whh1_t,
                                         preferred_element_type=jnp.float32)
        h1 = jnp.tanh(pre1)                                    # (B, HP)
        h1_scr[:, t, :] = h1

    # ---- epilogue: final hidden (masked 30-lane store) + Linear(30,1) over
    # the whole sequence: one multiply + one lane reduce + one dense store ----
    hout_ref[0] = h0[:, :HIDDEN]
    hout_ref[1] = h1[:, :HIDDEN]

    y = jnp.sum(h1_scr[...] * wlin_ref[...], axis=-1) + blin_ref[...]   # (B, T)
    out_ref[...] = y


def prepare_params(params):
    """One-time weight plumbing (pads, transposes, bias fusion).  Call once and
    reuse — keeps the per-forward wrapper free of layout ops."""
    (w_ih_l0, w_hh_l0, b_ih_l0, b_hh_l0,
     w_ih_l1, w_hh_l1, b_ih_l1, b_hh_l1,
     w_lin, b_lin) = params
    pk = HP - HIDDEN

    def pad_sq_t(m):   # (H, H) -> transpose -> pad to (HP, HP)
        return jnp.pad(m.T, ((0, pk), (0, pk)))

    wih0_t = jnp.pad(w_ih_l0.T, ((0, 0), (0, pk)))                     # (1, HP)
    whh0_t = pad_sq_t(w_hh_l0)                                         # (HP, HP)
    b0 = jnp.pad((b_ih_l0 + b_hh_l0).reshape(1, HIDDEN), ((0, 0), (0, pk)))
    wih1_t = pad_sq_t(w_ih_l1)                                         # (HP, HP)
    whh1_t = pad_sq_t(w_hh_l1)                                         # (HP, HP)
    b1 = jnp.pad((b_ih_l1 + b_hh_l1).reshape(1, HIDDEN), ((0, 0), (0, pk)))
    wlin = jnp.pad(w_lin, ((0, 0), (0, pk)))                           # (1, HP)
    blin = b_lin.reshape(1, 1)                                         # (1, 1)
    return (wih0_t, whh0_t, b0, wih1_t, whh1_t, b1, wlin, blin)


def net_forward(x, hidden_prev, prep):
    """Mirrors Net.forward(x, hidden_prev) -> (out, hidden_prev).
    `prep` is the output of prepare_params (weights already laid out)."""
    B, T, _ = x.shape
    x_bt = x.reshape(B, T)                  # input_size == 1; free reshape

    vmem = pl.BlockSpec(memory_space=pltpu.MemorySpace.VMEM)
    ins = (x_bt, hidden_prev) + tuple(prep)

    y, h_out = pl.pallas_call(
        rnn_linear_kernel,
        out_shape=(
            jax.ShapeDtypeStruct((B, T), jnp.float32),
            jax.ShapeDtypeStruct((NUM_LAYERS, B, HIDDEN), jnp.float32),
        ),
        in_specs=[vmem] * len(ins),
        out_specs=(vmem, vmem),
        scratch_shapes=[
            pltpu.VMEM((B, T, HP), jnp.float32),   # h0 seq, then layer-1 input proj
            pltpu.VMEM((B, T, HP), jnp.float32),   # h1 seq
        ],
    )(*ins)

    return y.reshape(B, T, 1), h_out


def net_forward_ref(x, hidden_prev, params):
    """Pure-JAX reference (mirrors PyTorch nn.RNN + nn.Linear semantics)."""
    (w_ih_l0, w_hh_l0, b_ih_l0, b_hh_l0,
     w_ih_l1, w_hh_l1, b_ih_l1, b_hh_l1,
     w_lin, b_lin) = params
    B, T, _ = x.shape
    h0, h1 = hidden_prev[0], hidden_prev[1]
    outs = []
    for t in range(T):
        xt = x[:, t, :]
        h0 = jnp.tanh(xt @ w_ih_l0.T + b_ih_l0 + h0 @ w_hh_l0.T + b_hh_l0)
        h1 = jnp.tanh(h0 @ w_ih_l1.T + b_ih_l1 + h1 @ w_hh_l1.T + b_hh_l1)
        outs.append(h1 @ w_lin.T + b_lin)
    out = jnp.stack(outs, axis=1)
    return out, jnp.stack([h0, h1], axis=0)


def init_params(key):
    """Deterministic init: normal(0, 1) for RNN params (as in the module),
    normal for the Linear layer (synthetic, not a checkpoint)."""
    keys = jax.random.split(key, 10)
    w_ih_l0 = jax.random.normal(keys[0], (HIDDEN, 1), jnp.float32)
    w_hh_l0 = jax.random.normal(keys[1], (HIDDEN, HIDDEN), jnp.float32)
    b_ih_l0 = jax.random.normal(keys[2], (HIDDEN,), jnp.float32)
    b_hh_l0 = jax.random.normal(keys[3], (HIDDEN,), jnp.float32)
    w_ih_l1 = jax.random.normal(keys[4], (HIDDEN, HIDDEN), jnp.float32)
    w_hh_l1 = jax.random.normal(keys[5], (HIDDEN, HIDDEN), jnp.float32)
    b_ih_l1 = jax.random.normal(keys[6], (HIDDEN,), jnp.float32)
    b_hh_l1 = jax.random.normal(keys[7], (HIDDEN,), jnp.float32)
    w_lin = 0.1 * jax.random.normal(keys[8], (1, HIDDEN), jnp.float32)
    b_lin = 0.1 * jax.random.normal(keys[9], (1,), jnp.float32)
    return (w_ih_l0, w_hh_l0, b_ih_l0, b_hh_l0,
            w_ih_l1, w_hh_l1, b_ih_l1, b_hh_l1,
            w_lin, b_lin)


if __name__ == "__main__":
    B, T = 2, 8
    root = jax.random.PRNGKey(0)
    k_param, k_x, k_h = jax.random.split(root, 3)

    params = init_params(k_param)
    prep = jax.block_until_ready(prepare_params(params))   # one-time layout work

    x = jax.random.normal(k_x, (B, T, 1), jnp.float32)
    hidden_prev = jax.random.normal(k_h, (NUM_LAYERS, B, HIDDEN), jnp.float32)

    fwd = jax.jit(net_forward)
    out, h_new = fwd(x, hidden_prev, prep)
    out = jax.block_until_ready(out)
    h_new = jax.block_until_ready(h_new)

    out_ref, h_ref = net_forward_ref(x, hidden_prev, params)
    assert out.shape == (B, T, 1) and h_new.shape == (NUM_LAYERS, B, HIDDEN)
    assert jnp.allclose(out, out_ref, atol=1e-4, rtol=1e-4), "out mismatch"
    assert jnp.allclose(h_new, h_ref, atol=1e-4, rtol=1e-4), "hidden mismatch"

    print("KERNEL_OK")
</pallas_src>

<mosaic_0001>
module attributes {stable_mosaic.version = 11 : i64} {
  func.func @rnn_linear_kernel(%arg0: memref<2x8xf32, #tpu.memory_space<vmem>>, %arg1: memref<2x2x30xf32, #tpu.memory_space<vmem>>, %arg2: memref<1x32xf32, #tpu.memory_space<vmem>>, %arg3: memref<32x32xf32, #tpu.memory_space<vmem>>, %arg4: memref<1x32xf32, #tpu.memory_space<vmem>>, %arg5: memref<32x32xf32, #tpu.memory_space<vmem>>, %arg6: memref<32x32xf32, #tpu.memory_space<vmem>>, %arg7: memref<1x32xf32, #tpu.memory_space<vmem>>, %arg8: memref<1x32xf32, #tpu.memory_space<vmem>>, %arg9: memref<1x1xf32, #tpu.memory_space<vmem>>, %arg10: memref<2x8xf32, #tpu.memory_space<vmem>>, %arg11: memref<2x2x30xf32, #tpu.memory_space<vmem>>, %arg12: memref<2x8x32xf32, #tpu.memory_space<vmem>>, %arg13: memref<2x8x32xf32, #tpu.memory_space<vmem>>) attributes {dimension_semantics = [], scalar_prefetch = 0 : i64, scratch_operands = 2 : i64, tpu.core_type = #tpu.core_type<tc>} {
    %c0 = arith.constant 0 : index
    %c0_0 = arith.constant 0 : index
    %0 = vector.load %arg3[%c0, %c0_0] : memref<32x32xf32, #tpu.memory_space<vmem>>, vector<32x32xf32>
    %c0_1 = arith.constant 0 : index
    %c0_2 = arith.constant 0 : index
    %1 = vector.load %arg6[%c0_1, %c0_2] : memref<32x32xf32, #tpu.memory_space<vmem>>, vector<32x32xf32>
    %cst = arith.constant 0.000000e+00 : f32
    %2 = vector.broadcast %cst : f32 to vector<2x2xf32>
    %c0_3 = arith.constant 0 : index
    %c0_4 = arith.constant 0 : index
    %c0_5 = arith.constant 0 : index
    %3 = vector.load %arg1[%c0_3, %c0_4, %c0_5] : memref<2x2x30xf32, #tpu.memory_space<vmem>>, vector<1x2x30xf32>
    %4 = vector.shape_cast %3 : vector<1x2x30xf32> to vector<2x30xf32>
    %5 = tpu.concatenate %4, %2 in 1 : vector<2x30xf32>, vector<2x2xf32> -> vector<2x32xf32>
    %c1 = arith.constant 1 : index
    %c0_6 = arith.constant 0 : index
    %c0_7 = arith.constant 0 : index
    %6 = vector.load %arg1[%c1, %c0_6, %c0_7] : memref<2x2x30xf32, #tpu.memory_space<vmem>>, vector<1x2x30xf32>
    %7 = vector.shape_cast %6 : vector<1x2x30xf32> to vector<2x30xf32>
    %8 = tpu.concatenate %7, %2 in 1 : vector<2x30xf32>, vector<2x2xf32> -> vector<2x32xf32>
    %c0_8 = arith.constant 0 : index
    %c0_9 = arith.constant 0 : index
    %9 = vector.load %arg0[%c0_8, %c0_9] : memref<2x8xf32, #tpu.memory_space<vmem>>, vector<2x8xf32>
    %10 = vector.shape_cast %9 : vector<2x8xf32> to vector<2x8x1xf32>
    %c0_10 = arith.constant 0 : index
    %c0_11 = arith.constant 0 : index
    %11 = vector.load %arg2[%c0_10, %c0_11] : memref<1x32xf32, #tpu.memory_space<vmem>>, vector<1x32xf32>
    %12 = vector.shape_cast %11 : vector<1x32xf32> to vector<1x1x32xf32>
    %13 = vector.broadcast %10 : vector<2x8x1xf32> to vector<2x8x32xf32>
    %14 = vector.broadcast %12 : vector<1x1x32xf32> to vector<2x8x32xf32>
    %15 = arith.mulf %13, %14 : vector<2x8x32xf32>
    %c0_12 = arith.constant 0 : index
    %c0_13 = arith.constant 0 : index
    %16 = vector.load %arg4[%c0_12, %c0_13] : memref<1x32xf32, #tpu.memory_space<vmem>>, vector<1x32xf32>
    %17 = vector.shape_cast %16 : vector<1x32xf32> to vector<1x1x32xf32>
    %18 = vector.broadcast %17 : vector<1x1x32xf32> to vector<2x8x32xf32>
    %19 = arith.addf %15, %18 : vector<2x8x32xf32>
    %20 = vector.extract_strided_slice %19 {offsets = [0, 0, 0], sizes = [2, 1, 32], strides = [1, 1, 1]} : vector<2x8x32xf32> to vector<2x1x32xf32>
    %21 = vector.shape_cast %20 : vector<2x1x32xf32> to vector<2x32xf32>
    %cst_14 = arith.constant dense<0.000000e+00> : vector<2x32xf32>
    %22 = tpu.matmul %5, %0, %cst_14 {dimension_numbers = #tpu.dot_dimension_numbers<[1], [0], [0], [1], [0, 0, 1, 1], [], []>} : vector<2x32xf32>, vector<32x32xf32>, vector<2x32xf32> -> vector<2x32xf32>
    %23 = arith.addf %21, %22 : vector<2x32xf32>
    %24 = math.tanh %23 : vector<2x32xf32>
    %c0_15 = arith.constant 0 : index
    %c0_16 = arith.constant 0 : index
    %c0_17 = arith.constant 0 : index
    %25 = vector.load %arg12[%c0_15, %c0_16, %c0_17] : memref<2x8x32xf32, #tpu.memory_space<vmem>>, vector<2x1x32xf32>
    %26 = vector.shape_cast %25 : vector<2x1x32xf32> to vector<2x32xf32>
    %27 = vector.shape_cast %24 : vector<2x32xf32> to vector<2x1x32xf32>
    tpu.vector_store %arg12[%c0_15, %c0_16, %c0_17], %27 {strides = array<i32>} : memref<2x8x32xf32, #tpu.memory_space<vmem>>, vector<2x1x32xf32>,
    %28 = vector.extract_strided_slice %19 {offsets = [0, 1, 0], sizes = [2, 1, 32], strides = [1, 1, 1]} : vector<2x8x32xf32> to vector<2x1x32xf32>
    %29 = vector.shape_cast %28 : vector<2x1x32xf32> to vector<2x32xf32>
    %cst_18 = arith.constant dense<0.000000e+00> : vector<2x32xf32>
    %30 = tpu.matmul %24, %0, %cst_18 {dimension_numbers = #tpu.dot_dimension_numbers<[1], [0], [0], [1], [0, 0, 1, 1], [], []>} : vector<2x32xf32>, vector<32x32xf32>, vector<2x32xf32> -> vector<2x32xf32>
    %31 = arith.addf %29, %30 : vector<2x32xf32>
    %32 = math.tanh %31 : vector<2x32xf32>
    %c0_19 = arith.constant 0 : index
    %c1_20 = arith.constant 1 : index
    %c0_21 = arith.constant 0 : index
    %33 = vector.load %arg12[%c0_19, %c1_20, %c0_21] : memref<2x8x32xf32, #tpu.memory_space<vmem>>, vector<2x1x32xf32>
    %34 = vector.shape_cast %33 : vector<2x1x32xf32> to vector<2x32xf32>
    %35 = vector.shape_cast %32 : vector<2x32xf32> to vector<2x1x32xf32>
    tpu.vector_store %arg12[%c0_19, %c1_20, %c0_21], %35 {strides = array<i32>} : memref<2x8x32xf32, #tpu.memory_space<vmem>>, vector<2x1x32xf32>,
    %36 = vector.extract_strided_slice %19 {offsets = [0, 2, 0], sizes = [2, 1, 32], strides = [1, 1, 1]} : vector<2x8x32xf32> to vector<2x1x32xf32>
    %37 = vector.shape_cast %36 : vector<2x1x32xf32> to vector<2x32xf32>
    %cst_22 = arith.constant dense<0.000000e+00> : vector<2x32xf32>
    %38 = tpu.matmul %32, %0, %cst_22 {dimension_numbers = #tpu.dot_dimension_numbers<[1], [0], [0], [1], [0, 0, 1, 1], [], []>} : vector<2x32xf32>, vector<32x32xf32>, vector<2x32xf32> -> vector<2x32xf32>
    %39 = arith.addf %37, %38 : vector<2x32xf32>
    %40 = math.tanh %39 : vector<2x32xf32>
    %c0_23 = arith.constant 0 : index
    %c2 = arith.constant 2 : index
    %c0_24 = arith.constant 0 : index
    %41 = vector.load %arg12[%c0_23, %c2, %c0_24] : memref<2x8x32xf32, #tpu.memory_space<vmem>>, vector<2x1x32xf32>
    %42 = vector.shape_cast %41 : vector<2x1x32xf32> to vector<2x32xf32>
    %43 = vector.shape_cast %40 : vector<2x32xf32> to vector<2x1x32xf32>
    tpu.vector_store %arg12[%c0_23, %c2, %c0_24], %43 {strides = array<i32>} : memref<2x8x32xf32, #tpu.memory_space<vmem>>, vector<2x1x32xf32>,
    %44 = vector.extract_strided_slice %19 {offsets = [0, 3, 0], sizes = [2, 1, 32], strides = [1, 1, 1]} : vector<2x8x32xf32> to vector<2x1x32xf32>
    %45 = vector.shape_cast %44 : vector<2x1x32xf32> to vector<2x32xf32>
    %cst_25 = arith.constant dense<0.000000e+00> : vector<2x32xf32>
    %46 = tpu.matmul %40, %0, %cst_25 {dimension_numbers = #tpu.dot_dimension_numbers<[1], [0], [0], [1], [0, 0, 1, 1], [], []>} : vector<2x32xf32>, vector<32x32xf32>, vector<2x32xf32> -> vector<2x32xf32>
    %47 = arith.addf %45, %46 : vector<2x32xf32>
    %48 = math.tanh %47 : vector<2x32xf32>
    %c0_26 = arith.constant 0 : index
    %c3 = arith.constant 3 : index
    %c0_27 = arith.constant 0 : index
    %49 = vector.load %arg12[%c0_26, %c3, %c0_27] : memref<2x8x32xf32, #tpu.memory_space<vmem>>, vector<2x1x32xf32>
    %50 = vector.shape_cast %49 : vector<2x1x32xf32> to vector<2x32xf32>
    %51 = vector.shape_cast %48 : vector<2x32xf32> to vector<2x1x32xf32>
    tpu.vector_store %arg12[%c0_26, %c3, %c0_27], %51 {strides = array<i32>} : memref<2x8x32xf32, #tpu.memory_space<vmem>>, vector<2x1x32xf32>,
    %52 = vector.extract_strided_slice %19 {offsets = [0, 4, 0], sizes = [2, 1, 32], strides = [1, 1, 1]} : vector<2x8x32xf32> to vector<2x1x32xf32>
    %53 = vector.shape_cast %52 : vector<2x1x32xf32> to vector<2x32xf32>
    %cst_28 = arith.constant dense<0.000000e+00> : vector<2x32xf32>
    %54 = tpu.matmul %48, %0, %cst_28 {dimension_numbers = #tpu.dot_dimension_numbers<[1], [0], [0], [1], [0, 0, 1, 1], [], []>} : vector<2x32xf32>, vector<32x32xf32>, vector<2x32xf32> -> vector<2x32xf32>
    %55 = arith.addf %53, %54 : vector<2x32xf32>
    %56 = math.tanh %55 : vector<2x32xf32>
    %c0_29 = arith.constant 0 : index
    %c4 = arith.constant 4 : index
    %c0_30 = arith.constant 0 : index
    %57 = vector.load %arg12[%c0_29, %c4, %c0_30] : memref<2x8x32xf32, #tpu.memory_space<vmem>>, vector<2x1x32xf32>
    %58 = vector.shape_cast %57 : vector<2x1x32xf32> to vector<2x32xf32>
    %59 = vector.shape_cast %56 : vector<2x32xf32> to vector<2x1x32xf32>
    tpu.vector_store %arg12[%c0_29, %c4, %c0_30], %59 {strides = array<i32>} : memref<2x8x32xf32, #tpu.memory_space<vmem>>, vector<2x1x32xf32>,
    %60 = vector.extract_strided_slice %19 {offsets = [0, 5, 0], sizes = [2, 1, 32], strides = [1, 1, 1]} : vector<2x8x32xf32> to vector<2x1x32xf32>
    %61 = vector.shape_cast %60 : vector<2x1x32xf32> to vector<2x32xf32>
    %cst_31 = arith.constant dense<0.000000e+00> : vector<2x32xf32>
    %62 = tpu.matmul %56, %0, %cst_31 {dimension_numbers = #tpu.dot_dimension_numbers<[1], [0], [0], [1], [0, 0, 1, 1], [], []>} : vector<2x32xf32>, vector<32x32xf32>, vector<2x32xf32> -> vector<2x32xf32>
    %63 = arith.addf %61, %62 : vector<2x32xf32>
    %64 = math.tanh %63 : vector<2x32xf32>
    %c0_32 = arith.constant 0 : index
    %c5 = arith.constant 5 : index
    %c0_33 = arith.constant 0 : index
    %65 = vector.load %arg12[%c0_32, %c5, %c0_33] : memref<2x8x32xf32, #tpu.memory_space<vmem>>, vector<2x1x32xf32>
    %66 = vector.shape_cast %65 : vector<2x1x32xf32> to vector<2x32xf32>
    %67 = vector.shape_cast %64 : vector<2x32xf32> to vector<2x1x32xf32>
    tpu.vector_store %arg12[%c0_32, %c5, %c0_33], %67 {strides = array<i32>} : memref<2x8x32xf32, #tpu.memory_space<vmem>>, vector<2x1x32xf32>,
    %68 = vector.extract_strided_slice %19 {offsets = [0, 6, 0], sizes = [2, 1, 32], strides = [1, 1, 1]} : vector<2x8x32xf32> to vector<2x1x32xf32>
    %69 = vector.shape_cast %68 : vector<2x1x32xf32> to vector<2x32xf32>
    %cst_34 = arith.constant dense<0.000000e+00> : vector<2x32xf32>
    %70 = tpu.matmul %64, %0, %cst_34 {dimension_numbers = #tpu.dot_dimension_numbers<[1], [0], [0], [1], [0, 0, 1, 1], [], []>} : vector<2x32xf32>, vector<32x32xf32>, vector<2x32xf32> -> vector<2x32xf32>
    %71 = arith.addf %69, %70 : vector<2x32xf32>
    %72 = math.tanh %71 : vector<2x32xf32>
    %c0_35 = arith.constant 0 : index
    %c6 = arith.constant 6 : index
    %c0_36 = arith.constant 0 : index
    %73 = vector.load %arg12[%c0_35, %c6, %c0_36] : memref<2x8x32xf32, #tpu.memory_space<vmem>>, vector<2x1x32xf32>
    %74 = vector.shape_cast %73 : vector<2x1x32xf32> to vector<2x32xf32>
    %75 = vector.shape_cast %72 : vector<2x32xf32> to vector<2x1x32xf32>
    tpu.vector_store %arg12[%c0_35, %c6, %c0_36], %75 {strides = array<i32>} : memref<2x8x32xf32, #tpu.memory_space<vmem>>, vector<2x1x32xf32>,
    %76 = vector.extract_strided_slice %19 {offsets = [0, 7, 0], sizes = [2, 1, 32], strides = [1, 1, 1]} : vector<2x8x32xf32> to vector<2x1x32xf32>
    %77 = vector.shape_cast %76 : vector<2x1x32xf32> to vector<2x32xf32>
    %cst_37 = arith.constant dense<0.000000e+00> : vector<2x32xf32>
    %78 = tpu.matmul %72, %0, %cst_37 {dimension_numbers = #tpu.dot_dimension_numbers<[1], [0], [0], [1], [0, 0, 1, 1], [], []>} : vector<2x32xf32>, vector<32x32xf32>, vector<2x32xf32> -> vector<2x32xf32>
    %79 = arith.addf %77, %78 : vector<2x32xf32>
    %80 = math.tanh %79 : vector<2x32xf32>
    %c0_38 = arith.constant 0 : index
    %c7 = arith.constant 7 : index
    %c0_39 = arith.constant 0 : index
    %81 = vector.load %arg12[%c0_38, %c7, %c0_39] : memref<2x8x32xf32, #tpu.memory_space<vmem>>, vector<2x1x32xf32>
    %82 = vector.shape_cast %81 : vector<2x1x32xf32> to vector<2x32xf32>
    %83 = vector.shape_cast %80 : vector<2x32xf32> to vector<2x1x32xf32>
    tpu.vector_store %arg12[%c0_38, %c7, %c0_39], %83 {strides = array<i32>} : memref<2x8x32xf32, #tpu.memory_space<vmem>>, vector<2x1x32xf32>,
    %c0_40 = arith.constant 0 : index
    %c0_41 = arith.constant 0 : index
    %c0_42 = arith.constant 0 : index
    %84 = vector.load %arg12[%c0_40, %c0_41, %c0_42] : memref<2x8x32xf32, #tpu.memory_space<vmem>>, vector<2x8x32xf32>
    %85 = vector.shape_cast %84 : vector<2x8x32xf32> to vector<16x32xf32>
    %c0_43 = arith.constant 0 : index
    %c0_44 = arith.constant 0 : index
    %86 = vector.load %arg5[%c0_43, %c0_44] : memref<32x32xf32, #tpu.memory_space<vmem>>, vector<32x32xf32>
    %cst_45 = arith.constant dense<0.000000e+00> : vector<16x32xf32>
    %87 = tpu.matmul %85, %86, %cst_45 {dimension_numbers = #tpu.dot_dimension_numbers<[1], [0], [0], [1], [0, 0, 1, 1], [], []>} : vector<16x32xf32>, vector<32x32xf32>, vector<16x32xf32> -> vector<16x32xf32>
    %c0_46 = arith.constant 0 : index
    %c0_47 = arith.constant 0 : index
    %88 = vector.load %arg7[%c0_46, %c0_47] : memref<1x32xf32, #tpu.memory_space<vmem>>, vector<1x32xf32>
    %89 = vector.broadcast %88 : vector<1x32xf32> to vector<16x32xf32>
    %90 = arith.addf %87, %89 : vector<16x32xf32>
    %91 = vector.shape_cast %90 : vector<16x32xf32> to vector<2x8x32xf32>
    %c0_48 = arith.constant 0 : index
    %c0_49 = arith.constant 0 : index
    %c0_50 = arith.constant 0 : index
    %92 = vector.load %arg12[%c0_48, %c0_49, %c0_50] : memref<2x8x32xf32, #tpu.memory_space<vmem>>, vector<2x8x32xf32>
    tpu.vector_store %arg12[%c0_48, %c0_49, %c0_50], %91 {strides = array<i32>} : memref<2x8x32xf32, #tpu.memory_space<vmem>>, vector<2x8x32xf32>,
    %c0_51 = arith.constant 0 : index
    %c0_52 = arith.constant 0 : index
    %c0_53 = arith.constant 0 : index
    %93 = vector.load %arg12[%c0_51, %c0_52, %c0_53] : memref<2x8x32xf32, #tpu.memory_space<vmem>>, vector<2x1x32xf32>
    %94 = vector.shape_cast %93 : vector<2x1x32xf32> to vector<2x32xf32>
    %cst_54 = arith.constant dense<0.000000e+00> : vector<2x32xf32>
    %95 = tpu.matmul %8, %1, %cst_54 {dimension_numbers = #tpu.dot_dimension_numbers<[1], [0], [0], [1], [0, 0, 1, 1], [], []>} : vector<2x32xf32>, vector<32x32xf32>, vector<2x32xf32> -> vector<2x32xf32>
    %96 = arith.addf %94, %95 : vector<2x32xf32>
    %97 = math.tanh %96 : vector<2x32xf32>
    %c0_55 = arith.constant 0 : index
    %c0_56 = arith.constant 0 : index
    %c0_57 = arith.constant 0 : index
    %98 = vector.load %arg13[%c0_55, %c0_56, %c0_57] : memref<2x8x32xf32, #tpu.memory_space<vmem>>, vector<2x1x32xf32>
    %99 = vector.shape_cast %98 : vector<2x1x32xf32> to vector<2x32xf32>
    %100 = vector.shape_cast %97 : vector<2x32xf32> to vector<2x1x32xf32>
    tpu.vector_store %arg13[%c0_55, %c0_56, %c0_57], %100 {strides = array<i32>} : memref<2x8x32xf32, #tpu.memory_space<vmem>>, vector<2x1x32xf32>,
    %c0_58 = arith.constant 0 : index
    %c1_59 = arith.constant 1 : index
    %c0_60 = arith.constant 0 : index
    %101 = vector.load %arg12[%c0_58, %c1_59, %c0_60] : memref<2x8x32xf32, #tpu.memory_space<vmem>>, vector<2x1x32xf32>
    %102 = vector.shape_cast %101 : vector<2x1x32xf32> to vector<2x32xf32>
    %cst_61 = arith.constant dense<0.000000e+00> : vector<2x32xf32>
    %103 = tpu.matmul %97, %1, %cst_61 {dimension_numbers = #tpu.dot_dimension_numbers<[1], [0], [0], [1], [0, 0, 1, 1], [], []>} : vector<2x32xf32>, vector<32x32xf32>, vector<2x32xf32> -> vector<2x32xf32>
    %104 = arith.addf %102, %103 : vector<2x32xf32>
    %105 = math.tanh %104 : vector<2x32xf32>
    %c0_62 = arith.constant 0 : index
    %c1_63 = arith.constant 1 : index
    %c0_64 = arith.constant 0 : index
    %106 = vector.load %arg13[%c0_62, %c1_63, %c0_64] : memref<2x8x32xf32, #tpu.memory_space<vmem>>, vector<2x1x32xf32>
    %107 = vector.shape_cast %106 : vector<2x1x32xf32> to vector<2x32xf32>
    %108 = vector.shape_cast %105 : vector<2x32xf32> to vector<2x1x32xf32>
    tpu.vector_store %arg13[%c0_62, %c1_63, %c0_64], %108 {strides = array<i32>} : memref<2x8x32xf32, #tpu.memory_space<vmem>>, vector<2x1x32xf32>,
    %c0_65 = arith.constant 0 : index
    %c2_66 = arith.constant 2 : index
    %c0_67 = arith.constant 0 : index
    %109 = vector.load %arg12[%c0_65, %c2_66, %c0_67] : memref<2x8x32xf32, #tpu.memory_space<vmem>>, vector<2x1x32xf32>
    %110 = vector.shape_cast %109 : vector<2x1x32xf32> to vector<2x32xf32>
    %cst_68 = arith.constant dense<0.000000e+00> : vector<2x32xf32>
    %111 = tpu.matmul %105, %1, %cst_68 {dimension_numbers = #tpu.dot_dimension_numbers<[1], [0], [0], [1], [0, 0, 1, 1], [], []>} : vector<2x32xf32>, vector<32x32xf32>, vector<2x32xf32> -> vector<2x32xf32>
    %112 = arith.addf %110, %111 : vector<2x32xf32>
    %113 = math.tanh %112 : vector<2x32xf32>
    %c0_69 = arith.constant 0 : index
    %c2_70 = arith.constant 2 : index
    %c0_71 = arith.constant 0 : index
    %114 = vector.load %arg13[%c0_69, %c2_70, %c0_71] : memref<2x8x32xf32, #tpu.memory_space<vmem>>, vector<2x1x32xf32>
    %115 = vector.shape_cast %114 : vector<2x1x32xf32> to vector<2x32xf32>
    %116 = vector.shape_cast %113 : vector<2x32xf32> to vector<2x1x32xf32>
    tpu.vector_store %arg13[%c0_69, %c2_70, %c0_71], %116 {strides = array<i32>} : memref<2x8x32xf32, #tpu.memory_space<vmem>>, vector<2x1x32xf32>,
    %c0_72 = arith.constant 0 : index
    %c3_73 = arith.constant 3 : index
    %c0_74 = arith.constant 0 : index
    %117 = vector.load %arg12[%c0_72, %c3_73, %c0_74] : memref<2x8x32xf32, #tpu.memory_space<vmem>>, vector<2x1x32xf32>
    %118 = vector.shape_cast %117 : vector<2x1x32xf32> to vector<2x32xf32>
    %cst_75 = arith.constant dense<0.000000e+00> : vector<2x32xf32>
    %119 = tpu.matmul %113, %1, %cst_75 {dimension_numbers = #tpu.dot_dimension_numbers<[1], [0], [0], [1], [0, 0, 1, 1], [], []>} : vector<2x32xf32>, vector<32x32xf32>, vector<2x32xf32> -> vector<2x32xf32>
    %120 = arith.addf %118, %119 : vector<2x32xf32>
    %121 = math.tanh %120 : vector<2x32xf32>
    %c0_76 = arith.constant 0 : index
    %c3_77 = arith.constant 3 : index
    %c0_78 = arith.constant 0 : index
    %122 = vector.load %arg13[%c0_76, %c3_77, %c0_78] : memref<2x8x32xf32, #tpu.memory_space<vmem>>, vector<2x1x32xf32>
    %123 = vector.shape_cast %122 : vector<2x1x32xf32> to vector<2x32xf32>
    %124 = vector.shape_cast %121 : vector<2x32xf32> to vector<2x1x32xf32>
    tpu.vector_store %arg13[%c0_76, %c3_77, %c0_78], %124 {strides = array<i32>} : memref<2x8x32xf32, #tpu.memory_space<vmem>>, vector<2x1x32xf32>,
    %c0_79 = arith.constant 0 : index
    %c4_80 = arith.constant 4 : index
    %c0_81 = arith.constant 0 : index
    %125 = vector.load %arg12[%c0_79, %c4_80, %c0_81] : memref<2x8x32xf32, #tpu.memory_space<vmem>>, vector<2x1x32xf32>
    %126 = vector.shape_cast %125 : vector<2x1x32xf32> to vector<2x32xf32>
    %cst_82 = arith.constant dense<0.000000e+00> : vector<2x32xf32>
    %127 = tpu.matmul %121, %1, %cst_82 {dimension_numbers = #tpu.dot_dimension_numbers<[1], [0], [0], [1], [0, 0, 1, 1], [], []>} : vector<2x32xf32>, vector<32x32xf32>, vector<2x32xf32> -> vector<2x32xf32>
    %128 = arith.addf %126, %127 : vector<2x32xf32>
    %129 = math.tanh %128 : vector<2x32xf32>
    %c0_83 = arith.constant 0 : index
    %c4_84 = arith.constant 4 : index
    %c0_85 = arith.constant 0 : index
    %130 = vector.load %arg13[%c0_83, %c4_84, %c0_85] : memref<2x8x32xf32, #tpu.memory_space<vmem>>, vector<2x1x32xf32>
    %131 = vector.shape_cast %130 : vector<2x1x32xf32> to vector<2x32xf32>
    %132 = vector.shape_cast %129 : vector<2x32xf32> to vector<2x1x32xf32>
    tpu.vector_store %arg13[%c0_83, %c4_84, %c0_85], %132 {strides = array<i32>} : memref<2x8x32xf32, #tpu.memory_space<vmem>>, vector<2x1x32xf32>,
    %c0_86 = arith.constant 0 : index
    %c5_87 = arith.constant 5 : index
    %c0_88 = arith.constant 0 : index
    %133 = vector.load %arg12[%c0_86, %c5_87, %c0_88] : memref<2x8x32xf32, #tpu.memory_space<vmem>>, vector<2x1x32xf32>
    %134 = vector.shape_cast %133 : vector<2x1x32xf32> to vector<2x32xf32>
    %cst_89 = arith.constant dense<0.000000e+00> : vector<2x32xf32>
    %135 = tpu.matmul %129, %1, %cst_89 {dimension_numbers = #tpu.dot_dimension_numbers<[1], [0], [0], [1], [0, 0, 1, 1], [], []>} : vector<2x32xf32>, vector<32x32xf32>, vector<2x32xf32> -> vector<2x32xf32>
    %136 = arith.addf %134, %135 : vector<2x32xf32>
    %137 = math.tanh %136 : vector<2x32xf32>
    %c0_90 = arith.constant 0 : index
    %c5_91 = arith.constant 5 : index
    %c0_92 = arith.constant 0 : index
    %138 = vector.load %arg13[%c0_90, %c5_91, %c0_92] : memref<2x8x32xf32, #tpu.memory_space<vmem>>, vector<2x1x32xf32>
    %139 = vector.shape_cast %138 : vector<2x1x32xf32> to vector<2x32xf32>
    %140 = vector.shape_cast %137 : vector<2x32xf32> to vector<2x1x32xf32>
    tpu.vector_store %arg13[%c0_90, %c5_91, %c0_92], %140 {strides = array<i32>} : memref<2x8x32xf32, #tpu.memory_space<vmem>>, vector<2x1x32xf32>,
    %c0_93 = arith.constant 0 : index
    %c6_94 = arith.constant 6 : index
    %c0_95 = arith.constant 0 : index
    %141 = vector.load %arg12[%c0_93, %c6_94, %c0_95] : memref<2x8x32xf32, #tpu.memory_space<vmem>>, vector<2x1x32xf32>
    %142 = vector.shape_cast %141 : vector<2x1x32xf32> to vector<2x32xf32>
    %cst_96 = arith.constant dense<0.000000e+00> : vector<2x32xf32>
    %143 = tpu.matmul %137, %1, %cst_96 {dimension_numbers = #tpu.dot_dimension_numbers<[1], [0], [0], [1], [0, 0, 1, 1], [], []>} : vector<2x32xf32>, vector<32x32xf32>, vector<2x32xf32> -> vector<2x32xf32>
    %144 = arith.addf %142, %143 : vector<2x32xf32>
    %145 = math.tanh %144 : vector<2x32xf32>
    %c0_97 = arith.constant 0 : index
    %c6_98 = arith.constant 6 : index
    %c0_99 = arith.constant 0 : index
    %146 = vector.load %arg13[%c0_97, %c6_98, %c0_99] : memref<2x8x32xf32, #tpu.memory_space<vmem>>, vector<2x1x32xf32>
    %147 = vector.shape_cast %146 : vector<2x1x32xf32> to vector<2x32xf32>
    %148 = vector.shape_cast %145 : vector<2x32xf32> to vector<2x1x32xf32>
    tpu.vector_store %arg13[%c0_97, %c6_98, %c0_99], %148 {strides = array<i32>} : memref<2x8x32xf32, #tpu.memory_space<vmem>>, vector<2x1x32xf32>,
    %c0_100 = arith.constant 0 : index
    %c7_101 = arith.constant 7 : index
    %c0_102 = arith.constant 0 : index
    %149 = vector.load %arg12[%c0_100, %c7_101, %c0_102] : memref<2x8x32xf32, #tpu.memory_space<vmem>>, vector<2x1x32xf32>
    %150 = vector.shape_cast %149 : vector<2x1x32xf32> to vector<2x32xf32>
    %cst_103 = arith.constant dense<0.000000e+00> : vector<2x32xf32>
    %151 = tpu.matmul %145, %1, %cst_103 {dimension_numbers = #tpu.dot_dimension_numbers<[1], [0], [0], [1], [0, 0, 1, 1], [], []>} : vector<2x32xf32>, vector<32x32xf32>, vector<2x32xf32> -> vector<2x32xf32>
    %152 = arith.addf %150, %151 : vector<2x32xf32>
    %153 = math.tanh %152 : vector<2x32xf32>
    %c0_104 = arith.constant 0 : index
    %c7_105 = arith.constant 7 : index
    %c0_106 = arith.constant 0 : index
    %154 = vector.load %arg13[%c0_104, %c7_105, %c0_106] : memref<2x8x32xf32, #tpu.memory_space<vmem>>, vector<2x1x32xf32>
    %155 = vector.shape_cast %154 : vector<2x1x32xf32> to vector<2x32xf32>
    %156 = vector.shape_cast %153 : vector<2x32xf32> to vector<2x1x32xf32>
    tpu.vector_store %arg13[%c0_104, %c7_105, %c0_106], %156 {strides = array<i32>} : memref<2x8x32xf32, #tpu.memory_space<vmem>>, vector<2x1x32xf32>,
    %157 = vector.extract_strided_slice %80 {offsets = [0, 0], sizes = [2, 30], strides = [1, 1]} : vector<2x32xf32> to vector<2x30xf32>
    %c0_107 = arith.constant 0 : index
    %c0_108 = arith.constant 0 : index
    %c0_109 = arith.constant 0 : index
    %158 = vector.load %arg11[%c0_107, %c0_108, %c0_109] : memref<2x2x30xf32, #tpu.memory_space<vmem>>, vector<1x2x30xf32>
    %159 = vector.shape_cast %158 : vector<1x2x30xf32> to vector<2x30xf32>
    %160 = vector.shape_cast %157 : vector<2x30xf32> to vector<1x2x30xf32>
    tpu.vector_store %arg11[%c0_107, %c0_108, %c0_109], %160 {strides = array<i32>} : memref<2x2x30xf32, #tpu.memory_space<vmem>>, vector<1x2x30xf32>,
    %161 = vector.extract_strided_slice %153 {offsets = [0, 0], sizes = [2, 30], strides = [1, 1]} : vector<2x32xf32> to vector<2x30xf32>
    %c1_110 = arith.constant 1 : index
    %c0_111 = arith.constant 0 : index
    %c0_112 = arith.constant 0 : index
    %162 = vector.load %arg11[%c1_110, %c0_111, %c0_112] : memref<2x2x30xf32, #tpu.memory_space<vmem>>, vector<1x2x30xf32>
    %163 = vector.shape_cast %162 : vector<1x2x30xf32> to vector<2x30xf32>
    %164 = vector.shape_cast %161 : vector<2x30xf32> to vector<1x2x30xf32>
    tpu.vector_store %arg11[%c1_110, %c0_111, %c0_112], %164 {strides = array<i32>} : memref<2x2x30xf32, #tpu.memory_space<vmem>>, vector<1x2x30xf32>,
    %c0_113 = arith.constant 0 : index
    %c0_114 = arith.constant 0 : index
    %c0_115 = arith.constant 0 : index
    %165 = vector.load %arg13[%c0_113, %c0_114, %c0_115] : memref<2x8x32xf32, #tpu.memory_space<vmem>>, vector<2x8x32xf32>
    %c0_116 = arith.constant 0 : index
    %c0_117 = arith.constant 0 : index
    %166 = vector.load %arg8[%c0_116, %c0_117] : memref<1x32xf32, #tpu.memory_space<vmem>>, vector<1x32xf32>
    %167 = vector.shape_cast %166 : vector<1x32xf32> to vector<1x1x32xf32>
    %168 = vector.broadcast %167 : vector<1x1x32xf32> to vector<2x8x32xf32>
    %169 = arith.mulf %165, %168 : vector<2x8x32xf32>
    %cst_118 = arith.constant dense<0.000000e+00> : vector<2x8xf32>
    %170 = vector.multi_reduction <add>, %169, %cst_118 [2] : vector<2x8x32xf32> to vector<2x8xf32>
    %c0_119 = arith.constant 0 : index
    %c0_120 = arith.constant 0 : index
    %171 = vector.load %arg9[%c0_119, %c0_120] : memref<1x1xf32, #tpu.memory_space<vmem>>, vector<1x1xf32>
    %172 = vector.broadcast %171 : vector<1x1xf32> to vector<2x8xf32>
    %173 = arith.addf %170, %172 : vector<2x8xf32>
    %c0_121 = arith.constant 0 : index
    %c0_122 = arith.constant 0 : index
    %174 = vector.load %arg10[%c0_121, %c0_122] : memref<2x8xf32, #tpu.memory_space<vmem>>, vector<2x8xf32>
    tpu.vector_store %arg10[%c0_121, %c0_122], %173 {strides = array<i32>} : memref<2x8xf32, #tpu.memory_space<vmem>>, vector<2x8xf32>,
    return
  }
}

</mosaic_0001>

<llo_original>
// kernel: net_forward.1
$region0: #{net_forward.1}
  #allocation0 [shape = 'u32[]', space=smem, size = 0x4, offset = 0x4, fixed_abs, tag = 'smem constant byte address 0x4 - core index']
  #allocation1 [shape = 'u32[144,128]{1,0:T(1,128)}', space=vmem, size = 0x12000, scoped, tag = 'internal scratch']
  #allocation2 [shape = 'f32[2,8,32]{2,1,0:T(8,128)}', space=vmem, size = 0x2000, scoped, tag = 'scratch operand']
  #allocation3 [shape = 'f32[2,8,32]{2,1,0:T(8,128)}', space=vmem, size = 0x2000, scoped, tag = 'scratch operand']
  #allocation4 [shape = 'f32[1,1]{1,0:T(1,128)S(1)}', space=vmem, size = 0x200, scoped, tag = 'scoped memory for net_forward.1']
  %s0 = inlined_call_operand.hbm [shape: f32[2,8], index: 0, kind: input, shape index: {}]
  %s1 = inlined_call_operand.vmem [shape: f32[2,2,30], index: 1, kind: input, shape index: {}]
  %s2 = inlined_call_operand.vmem [shape: f32[1,32], index: 2, kind: input, shape index: {}]
  %s3 = inlined_call_operand.hbm [shape: f32[32,32], index: 3, kind: input, shape index: {}]
  %s4 = inlined_call_operand.vmem [shape: f32[1,32], index: 4, kind: input, shape index: {}]
  %s5 = inlined_call_operand.hbm [shape: f32[32,32], index: 5, kind: input, shape index: {}]
  %s6 = inlined_call_operand.hbm [shape: f32[32,32], index: 6, kind: input, shape index: {}]
  %s7 = inlined_call_operand.vmem [shape: f32[1,32], index: 7, kind: input, shape index: {}]
  %s8 = inlined_call_operand.vmem [shape: f32[1,32], index: 8, kind: input, shape index: {}]
  %s9 = inlined_call_operand.<no memory space> [shape: f32[1,1], index: 9, kind: input, shape index: {}]
  %s10 = inlined_call_operand.hbm [shape: f32[2,8], index: 10, kind: output, shape index: {0}]
  %s11 = inlined_call_operand.hbm [shape: f32[2,2,30], index: 11, kind: output, shape index: {1}]
  %12 = xla_tuple %s10, %s11
  %s13 = sld [smem:[#allocation0]]
  $region74: #{net_forward.1} parent=0
    _
  %s15 = ssub.s32 1, %s13
  %s16 = scalar_select 0, %s15, %s13
  %v17 = vstv %s9
  %18 = vst [vmem:[#allocation4] sm:$0x1] %v17
  $region1: #{net_forward.1} parent=0
    #allocation5 [shape = 'u8[1024]{0}', space=vmem, size = 0x400, scoped, tag = 'input window, operand 0, single buffered']
    #allocation6 [shape = 's32[1]{0}', space=sflag, size = 0x4, scoped, tag = 'scoped memory for net_forward.1']
    #allocation7 [shape = 's32[1]{0}', space=sflag, size = 0x4, scoped, tag = 'scoped memory for net_forward.1']
    #allocation8 [shape = 'u8[16384]{0}', space=vmem, size = 0x4000, scoped, tag = 'input window, operand 3, single buffered']
    #allocation9 [shape = 's32[1]{0}', space=sflag, size = 0x4, scoped, tag = 'scoped memory for net_forward.1']
    #allocation10 [shape = 'u8[16384]{0}', space=vmem, size = 0x4000, scoped, tag = 'input window, operand 5, single buffered']
    #allocation11 [shape = 'u8[16384]{0}', space=vmem, size = 0x4000, scoped, tag = 'input window, operand 6, single buffered']
    #allocation12 [shape = 's32[1]{0}', space=sflag, size = 0x4, scoped, tag = 'scoped memory for net_forward.1']
    #allocation13 [shape = 'u8[1024]{0}', space=vmem, size = 0x400, scoped, tag = 'output window, operand 0, single buffered']
    #allocation14 [shape = 'u8[2048]{0}', space=vmem, size = 0x800, scoped, tag = 'output window, operand 1, single buffered']
    #allocation15 [shape = 's32[1]{0}', space=sflag, size = 0x4, scoped, tag = 'scoped memory for net_forward.1']
    %19 = vsyncpa [#allocation6], 0
    %20 = vsyncpa [#allocation9], 0
    %21 = vsyncpa [#allocation12], 0
    %22 = vsyncpa [#allocation7], 0
    %23 = vsyncpa [#allocation15], 0
    // Predicated region
    $region2: #{net_forward.1} parent=1 // pred_check
      _
    $region3: #{net_forward.1} parent=1 // pred_check_branch
      %25 = sbr.rel (0) target = $region5
    $region4: #{net_forward.1} parent=1 // pred_region
      %s27 = ssub.s32 32, 32
      %28 = vsyncadd [#allocation6], %s27
      %s30 = sshll.u32 [#allocation5], 4
      %s31 = int_to_ptr.vmem [resolvable:$true] %s30
      %33 = dma.hbm_to_vmem [thread:$0]  %s0, 32, %s31, [#allocation6]
    $region5: #{net_forward.1} parent=1 // pred_fallthru
      _
    // Predicated region
    $region6: #{net_forward.1} parent=1 // pred_check
      _
    $region7: #{net_forward.1} parent=1 // pred_check_branch
      %35 = sbr.rel (0) target = $region9
    $region8: #{net_forward.1} parent=1 // pred_region
      _
    $region9: #{net_forward.1} parent=1 // pred_fallthru
      _
    // Predicated region
    $region10: #{net_forward.1} parent=1 // pred_check
      _
    $region11: #{net_forward.1} parent=1 // pred_check_branch
      %37 = sbr.rel (0) target = $region13
    $region12: #{net_forward.1} parent=1 // pred_region
      _
    $region13: #{net_forward.1} parent=1 // pred_fallthru
      _
    // Predicated region
    $region14: #{net_forward.1} parent=1 // pred_check
      _
    $region15: #{net_forward.1} parent=1 // pred_check_branch
      %39 = sbr.rel (0) target = $region17
    $region16: #{net_forward.1} parent=1 // pred_region
      %s41 = ssub.s32 512, 512
      %42 = vsyncadd [#allocation9], %s41
      %s43 = sshll.u32 [#allocation8], 4
      %s44 = int_to_ptr.vmem [resolvable:$true] %s43
      %49 = dma.hbm_to_vmem [thread:$0]  %s3, 512, %s44, [#allocation9], 128, 128, 8
    $region17: #{net_forward.1} parent=1 // pred_fallthru
      _
    // Predicated region
    $region18: #{net_forward.1} parent=1 // pred_check
      _
    $region19: #{net_forward.1} parent=1 // pred_check_branch
      %51 = sbr.rel (0) target = $region21
    $region20: #{net_forward.1} parent=1 // pred_region
      _
    $region21: #{net_forward.1} parent=1 // pred_fallthru
      _
    // Predicated region
    $region22: #{net_forward.1} parent=1 // pred_check
      _
    $region23: #{net_forward.1} parent=1 // pred_check_branch
      %53 = sbr.rel (0) target = $region25
    $region24: #{net_forward.1} parent=1 // pred_region
      %s55 = ssub.s32 512, 512
      %56 = vsyncadd [#allocation9], %s55
      %s57 = sshll.u32 [#allocation10], 4
      %s58 = int_to_ptr.vmem [resolvable:$true] %s57
      %63 = dma.hbm_to_vmem [thread:$0]  %s5, 512, %s58, [#allocation9], 128, 128, 8
    $region25: #{net_forward.1} parent=1 // pred_fallthru
      _
    // Predicated region
    $region26: #{net_forward.1} parent=1 // pred_check
      _
    $region27: #{net_forward.1} parent=1 // pred_check_branch
      %65 = sbr.rel (0) target = $region29
    $region28: #{net_forward.1} parent=1 // pred_region
      %s67 = ssub.s32 512, 512
      %68 = vsyncadd [#allocation12], %s67
      %s69 = sshll.u32 [#allocation11], 4
      %s70 = int_to_ptr.vmem [resolvable:$true] %s69
      %75 = dma.hbm_to_vmem [thread:$0]  %s6, 512, %s70, [#allocation12], 128, 128, 8
    $region29: #{net_forward.1} parent=1 // pred_fallthru
      _
    // Predicated region
    $region30: #{net_forward.1} parent=1 // pred_check
      _
    $region31: #{net_forward.1} parent=1 // pred_check_branch
      %77 = sbr.rel (0) target = $region33
    $region32: #{net_forward.1} parent=1 // pred_region
      _
    $region33: #{net_forward.1} parent=1 // pred_fallthru
      _
    // Predicated region
    $region34: #{net_forward.1} parent=1 // pred_check
      _
    $region35: #{net_forward.1} parent=1 // pred_check_branch
      %79 = sbr.rel (0) target = $region37
    $region36: #{net_forward.1} parent=1 // pred_region
      _
    $region37: #{net_forward.1} parent=1 // pred_fallthru
      _
    // Predicated region
    $region38: #{net_forward.1} parent=1 // pred_check
      _
    $region39: #{net_forward.1} parent=1 // pred_check_branch
      %81 = sbr.rel (0) target = $region41
    $region40: #{net_forward.1} parent=1 // pred_region
      _
    $region41: #{net_forward.1} parent=1 // pred_fallthru
      _
    // Predicated region
    $region42: #{net_forward.1} parent=1 // pred_check
      _
    $region43: #{net_forward.1} parent=1 // pred_check_branch
      %83 = sbr.rel (0) target = $region45
    $region44: #{net_forward.1} parent=1 // pred_region
      %84 = dma.done [#allocation6], 32
    $region45: #{net_forward.1} parent=1 // pred_fallthru
      _
    // Predicated region
    $region46: #{net_forward.1} parent=1 // pred_check
      _
    $region47: #{net_forward.1} parent=1 // pred_check_branch
      %86 = sbr.rel (0) target = $region49
    $region48: #{net_forward.1} parent=1 // pred_region
      %87 = dma.done [#allocation9], 512
    $region49: #{net_forward.1} parent=1 // pred_fallthru
      _
    // Predicated region
    $region50: #{net_forward.1} parent=1 // pred_check
      _
    $region51: #{net_forward.1} parent=1 // pred_check_branch
      %89 = sbr.rel (0) target = $region53
    $region52: #{net_forward.1} parent=1 // pred_region
      %90 = dma.done [#allocation9], 512
    $region53: #{net_forward.1} parent=1 // pred_fallthru
      _
    // Predicated region
    $region54: #{net_forward.1} parent=1 // pred_check
      _
    $region55: #{net_forward.1} parent=1 // pred_check_branch
      %92 = sbr.rel (0) target = $region57
    $region56: #{net_forward.1} parent=1 // pred_region
      %93 = dma.done [#allocation12], 512
    $region57: #{net_forward.1} parent=1 // pred_fallthru
      _
    %v94 = vld [vmem:[#allocation8] sm:$0xff]
    %v95 = vld [vmem:[#allocation8 + $0x8] sm:$0xff]
    %v96 = vld [vmem:[#allocation8 + $0x10] sm:$0xff]
    %v97 = vld [vmem:[#allocation8 + $0x18] sm:$0xff]
    %v98 = vld [vmem:[#allocation11] sm:$0xff]
    %v99 = vld [vmem:[#allocation11 + $0x8] sm:$0xff]
    %v100 = vld [vmem:[#allocation11 + $0x10] sm:$0xff]
    %v101 = vld [vmem:[#allocation11 + $0x18] sm:$0xff]
    %v102 = vld [vmem:[%s1] sm:$0x3]
    %vm103 = vcmask 244736
    %v104 = vsel %vm103, %v102, 0.0
    %s105 = scalar_lea.vmem %s1, 2
    %v106 = vld [vmem:[%s105] sm:$0x3]
    %v107 = vsel %vm103, %v106, 0.0
    %v108 = vld [vmem:[#allocation5] sm:$0x3]
    %v109 = vlaneseq
    %v110 = vshrl.u32 %v109, 7
    %v111 = vsub.s32 0, %v110
    %v112 = vrot.slane %v108, %v111
    %114 = vbcast.lane.b32.xlu0 %v112, 256
    %v115 = vpop.permute.xlu0 %114
    %v116 = vlaneseq
    %v117 = vshrl.u32 %v116, 7
    %v118 = vsub.s32 1, %v117
    %v119 = vrot.slane %v108, %v118
    %121 = vbcast.lane.b32.xlu0 %v119, 256
    %v122 = vpop.permute.xlu0 %121
    %v123 = vld [vmem:[%s2] sm:$0x1]
    %v125 = vlaneseq
    %v126 = vshrl.u32 %v125, 7
    %v127 = vsub.s32 0, %v126
    %v128 = vrot.slane %v123, %v127
    %v130 = vmul.f32 %v115, %v128
    %v131 = vmul.f32 %v122, %v128
    %v132 = vld [vmem:[%s4] sm:$0x1]
    %v134 = vlaneseq
    %v135 = vshrl.u32 %v134, 7
    %v136 = vsub.s32 0, %v135
    %v137 = vrot.slane %v132, %v136
    %v139 = vadd.f32 %v130, %v137
    %v140 = vadd.f32 %v131, %v137
    %vm141 = vcmask 261120
    %v143 = vsel %vm141, %v104, 0
    %145 = vmatprep.subr.mxu0 0.0
    %146 = vmatpush1.msra.mxu0 0.0
    %147 = vmatprep.subr.mxu0 0.0
    %148 = vmatpush1.msra.mxu0 0.0
    %149 = vmatprep.subr.mxu0 0.0
    %150 = vmatpush1.msra.mxu0 0.0
    %151 = vmatprep.subr.mxu0 0.0
    %152 = vmatpush1.msra.mxu0 0.0
    %153 = vmatprep.subr.mxu0 0.0
    %154 = vmatpush1.msra.mxu0 0.0
    %155 = vmatprep.subr.mxu0 0.0
    %156 = vmatpush1.msra.mxu0 0.0
    %157 = vmatprep.subr.mxu0 0.0
    %158 = vmatpush1.msra.mxu0 0.0
    %159 = vmatprep.subr.mxu0 0.0
    %160 = vmatpush1.msra.mxu0 0.0
    %161 = vmatprep.subr.mxu0 0.0
    %162 = vmatpush1.msra.mxu0 0.0
    %163 = vmatprep.subr.mxu0 0.0
    %164 = vmatpush1.msra.mxu0 0.0
    %165 = vmatprep.subr.mxu0 0.0
    %166 = vmatpush1.msra.mxu0 0.0
    %167 = vmatprep.subr.mxu0 0.0
    %168 = vmatpush1.msra.mxu0 0.0
    %169 = vmatprep.subr.mxu0 0.0
    %170 = vmatpush1.msra.mxu0 %v97
    %171 = vmatprep.subr.mxu0 0.0
    %172 = vmatpush1.msra.mxu0 %v96
    %173 = vmatprep.subr.mxu0 0.0
    %174 = vmatpush1.msra.mxu0 %v95
    %175 = vmatprep.subr.mxu0 0.0
    %176 = vmatpush1.msra.mxu0 %v94
    %177 = vmatprep.subr.mxu0 0.0
    %178 = vmatpush2.msra.mxu0 0.0
    %179 = vmatprep.subr.mxu0 0.0
    %180 = vmatpush2.msra.mxu0 0.0
    %181 = vmatprep.subr.mxu0 0.0
    %182 = vmatpush2.msra.mxu0 0.0
    %183 = vmatprep.subr.mxu0 0.0
    %184 = vmatpush2.msra.mxu0 0.0
    %185 = vmatprep.subr.mxu0 0.0
    %186 = vmatpush2.msra.mxu0 0.0
    %187 = vmatprep.subr.mxu0 0.0
    %188 = vmatpush2.msra.mxu0 0.0
    %189 = vmatprep.subr.mxu0 0.0
    %190 = vmatpush2.msra.mxu0 0.0
    %191 = vmatprep.subr.mxu0 0.0
    %192 = vmatpush2.msra.mxu0 0.0
    %193 = vmatprep.subr.mxu0 0.0
    %194 = vmatpush2.msra.mxu0 0.0
    %195 = vmatprep.subr.mxu0 0.0
    %196 = vmatpush2.msra.mxu0 0.0
    %197 = vmatprep.subr.mxu0 0.0
    %198 = vmatpush2.msra.mxu0 0.0
    %199 = vmatprep.subr.mxu0 0.0
    %200 = vmatpush2.msra.mxu0 0.0
    %201 = vmatprep.subr.mxu0 0.0
    %202 = vmatpush2.msra.mxu0 0.0
    %203 = vmatprep.subr.mxu0 0.0
    %204 = vmatpush2.msra.mxu0 0.0
    %205 = vmatprep.subr.mxu0 0.0
    %206 = vmatpush2.msra.mxu0 0.0
    %207 = vmatprep.subr.mxu0 0.0
    %208 = vmatpush2.msra.mxu0 0.0
    %209 = vmatprep.mubr.f32.mxu0 0.0
    %210 = vmatmul.mubr.f32.gmra.mxu0 %v143
    %v211 = vpop.f32.mrf.mxu0
    %v212 = vadd.f32 0.0, %v211
    %v213 = vpop.f32.mrf.mxu0
    %214 = vdwg.mxu0
    %v216 = vrot.slane %v212, 1
    %v219 = vadd.f32 %v139, %v212
    %v220 = vadd.f32 %v140, %v216
    %v221 = vtanh.pop %v219
    %v222 = vtanh.pop %v220
    %vm223 = vcmask 253952
    %224 = vst.msk [vmem:[#allocation2] sm:$0x1] %vm223, %v221
    %225 = vst.msk [vmem:[#allocation2 + $0x8] sm:$0x1] %vm223, %v222
    %v228 = vrot.slane %v222, 7
    %vm229 = vcmask 1041409
    %v230 = vsel %vm229, %v228, %v221
    %v231 = vsel %vm141, %v230, 0
    %233 = vmatprep.subr.mxu0 0.0
    %234 = vmatpush1.msra.mxu0 0.0
    %235 = vmatprep.subr.mxu0 0.0
    %236 = vmatpush1.msra.mxu0 0.0
    %237 = vmatprep.subr.mxu0 0.0
    %238 = vmatpush1.msra.mxu0 0.0
    %239 = vmatprep.subr.mxu0 0.0
    %240 = vmatpush1.msra.mxu0 0.0
    %241 = vmatprep.subr.mxu0 0.0
    %242 = vmatpush1.msra.mxu0 0.0
    %243 = vmatprep.subr.mxu0 0.0
    %244 = vmatpush1.msra.mxu0 0.0
    %245 = vmatprep.subr.mxu0 0.0
    %246 = vmatpush1.msra.mxu0 0.0
    %247 = vmatprep.subr.mxu0 0.0
    %248 = vmatpush1.msra.mxu0 0.0
    %249 = vmatprep.subr.mxu0 0.0
    %250 = vmatpush1.msra.mxu0 0.0
    %251 = vmatprep.subr.mxu0 0.0
    %252 = vmatpush1.msra.mxu0 0.0
    %253 = vmatprep.subr.mxu0 0.0
    %254 = vmatpush1.msra.mxu0 0.0
    %255 = vmatprep.subr.mxu0 0.0
    %256 = vmatpush1.msra.mxu0 0.0
    %257 = vmatprep.subr.mxu0 0.0
    %258 = vmatpush1.msra.mxu0 %v97
    %259 = vmatprep.subr.mxu0 0.0
    %260 = vmatpush1.msra.mxu0 %v96
    %261 = vmatprep.subr.mxu0 0.0
    %262 = vmatpush1.msra.mxu0 %v95
    %263 = vmatprep.subr.mxu0 0.0
    %264 = vmatpush1.msra.mxu0 %v94
    %265 = vmatprep.subr.mxu0 0.0
    %266 = vmatpush2.msra.mxu0 0.0
    %267 = vmatprep.subr.mxu0 0.0
    %268 = vmatpush2.msra.mxu0 0.0
    %269 = vmatprep.subr.mxu0 0.0
    %270 = vmatpush2.msra.mxu0 0.0
    %271 = vmatprep.subr.mxu0 0.0
    %272 = vmatpush2.msra.mxu0 0.0
    %273 = vmatprep.subr.mxu0 0.0
    %274 = vmatpush2.msra.mxu0 0.0
    %275 = vmatprep.subr.mxu0 0.0
    %276 = vmatpush2.msra.mxu0 0.0
    %277 = vmatprep.subr.mxu0 0.0
    %278 = vmatpush2.msra.mxu0 0.0
    %279 = vmatprep.subr.mxu0 0.0
    %280 = vmatpush2.msra.mxu0 0.0
    %281 = vmatprep.subr.mxu0 0.0
    %282 = vmatpush2.msra.mxu0 0.0
    %283 = vmatprep.subr.mxu0 0.0
    %284 = vmatpush2.msra.mxu0 0.0
    %285 = vmatprep.subr.mxu0 0.0
    %286 = vmatpush2.msra.mxu0 0.0
    %287 = vmatprep.subr.mxu0 0.0
    %288 = vmatpush2.msra.mxu0 0.0
    %289 = vmatprep.subr.mxu0 0.0
    %290 = vmatpush2.msra.mxu0 0.0
    %291 = vmatprep.subr.mxu0 0.0
    %292 = vmatpush2.msra.mxu0 0.0
    %293 = vmatprep.subr.mxu0 0.0
    %294 = vmatpush2.msra.mxu0 0.0
    %295 = vmatprep.subr.mxu0 0.0
    %296 = vmatpush2.msra.mxu0 0.0
    %297 = vmatprep.mubr.f32.mxu0 0.0
    %298 = vmatmul.mubr.f32.gmra.mxu0 %v231
    %v299 = vpop.f32.mrf.mxu0
    %v300 = vadd.f32 0.0, %v299
    %v301 = vpop.f32.mrf.mxu0
    %302 = vdwg.mxu0
    %v304 = vrot.slane %v300, 7
    %v307 = vadd.f32 %v139, %v304
    %v308 = vadd.f32 %v140, %v300
    %v309 = vtanh.pop %v307
    %v310 = vtanh.pop %v308
    %vm311 = vcmask 254977
    %312 = vst.msk [vmem:[#allocation2] sm:$0x2] %vm311, %v309
    %313 = vst.msk [vmem:[#allocation2 + $0x8] sm:$0x2] %vm311, %v310
    %v316 = vrot.slane %v309, 1
    %v317 = vsel %vm229, %v310, %v316
    %v318 = vsel %vm141, %v317, 0
    %320 = vmatprep.subr.mxu0 0.0
    %321 = vmatpush1.msra.mxu0 0.0
    %322 = vmatprep.subr.mxu0 0.0
    %323 = vmatpush1.msra.mxu0 0.0
    %324 = vmatprep.subr.mxu0 0.0
    %325 = vmatpush1.msra.mxu0 0.0
    %326 = vmatprep.subr.mxu0 0.0
    %327 = vmatpush1.msra.mxu0 0.0
    %328 = vmatprep.subr.mxu0 0.0
    %329 = vmatpush1.msra.mxu0 0.0
    %330 = vmatprep.subr.mxu0 0.0
    %331 = vmatpush1.msra.mxu0 0.0
    %332 = vmatprep.subr.mxu0 0.0
    %333 = vmatpush1.msra.mxu0 0.0
    %334 = vmatprep.subr.mxu0 0.0
    %335 = vmatpush1.msra.mxu0 0.0
    %336 = vmatprep.subr.mxu0 0.0
    %337 = vmatpush1.msra.mxu0 0.0
    %338 = vmatprep.subr.mxu0 0.0
    %339 = vmatpush1.msra.mxu0 0.0
    %340 = vmatprep.subr.mxu0 0.0
    %341 = vmatpush1.msra.mxu0 0.0
    %342 = vmatprep.subr.mxu0 0.0
    %343 = vmatpush1.msra.mxu0 0.0
    %344 = vmatprep.subr.mxu0 0.0
    %345 = vmatpush1.msra.mxu0 %v97
    %346 = vmatprep.subr.mxu0 0.0
    %347 = vmatpush1.msra.mxu0 %v96
    %348 = vmatprep.subr.mxu0 0.0
    %349 = vmatpush1.msra.mxu0 %v95
    %350 = vmatprep.subr.mxu0 0.0
    %351 = vmatpush1.msra.mxu0 %v94
    %352 = vmatprep.subr.mxu0 0.0
    %353 = vmatpush2.msra.mxu0 0.0
    %354 = vmatprep.subr.mxu0 0.0
    %355 = vmatpush2.msra.mxu0 0.0
    %356 = vmatprep.subr.mxu0 0.0
    %357 = vmatpush2.msra.mxu0 0.0
    %358 = vmatprep.subr.mxu0 0.0
    %359 = vmatpush2.msra.mxu0 0.0
    %360 = vmatprep.subr.mxu0 0.0
    %361 = vmatpush2.msra.mxu0 0.0
    %362 = vmatprep.subr.mxu0 0.0
    %363 = vmatpush2.msra.mxu0 0.0
    %364 = vmatprep.subr.mxu0 0.0
    %365 = vmatpush2.msra.mxu0 0.0
    %366 = vmatprep.subr.mxu0 0.0
    %367 = vmatpush2.msra.mxu0 0.0
    %368 = vmatprep.subr.mxu0 0.0
    %369 = vmatpush2.msra.mxu0 0.0
    %370 = vmatprep.subr.mxu0 0.0
    %371 = vmatpush2.msra.mxu0 0.0
    %372 = vmatprep.subr.mxu0 0.0
    %373 = vmatpush2.msra.mxu0 0.0
    %374 = vmatprep.subr.mxu0 0.0
    %375 = vmatpush2.msra.mxu0 0.0
    %376 = vmatprep.subr.mxu0 0.0
    %377 = vmatpush2.msra.mxu0 0.0
    %378 = vmatprep.subr.mxu0 0.0
    %379 = vmatpush2.msra.mxu0 0.0
    %380 = vmatprep.subr.mxu0 0.0
    %381 = vmatpush2.msra.mxu0 0.0
    %382 = vmatprep.subr.mxu0 0.0
    %383 = vmatpush2.msra.mxu0 0.0
    %384 = vmatprep.mubr.f32.mxu0 0.0
    %385 = vmatmul.mubr.f32.gmra.mxu0 %v318
    %v386 = vpop.f32.mrf.mxu0
    %v387 = vadd.f32 0.0, %v386
    %v388 = vpop.f32.mrf.mxu0
    %389 = vdwg.mxu0
    %v391 = vrot.slane %v387, 6
    %v392 = vrot.slane %v387, 7
    %v395 = vadd.f32 %v139, %v391
    %v396 = vadd.f32 %v140, %v392
    %v397 = vtanh.pop %v395
    %v398 = vtanh.pop %v396
    %vm399 = vcmask 256002
    %400 = vst.msk [vmem:[#allocation2] sm:$0x4] %vm399, %v397
    %401 = vst.msk [vmem:[#allocation2 + $0x8] sm:$0x4] %vm399, %v398
    %v404 = vrot.slane %v397, 2
    %v405 = vrot.slane %v398, 1
    %v406 = vsel %vm229, %v405, %v404
    %v407 = vsel %vm141, %v406, 0
    %409 = vmatprep.subr.mxu0 0.0
    %410 = vmatpush1.msra.mxu0 0.0
    %411 = vmatprep.subr.mxu0 0.0
    %412 = vmatpush1.msra.mxu0 0.0
    %413 = vmatprep.subr.mxu0 0.0
    %414 = vmatpush1.msra.mxu0 0.0
    %415 = vmatprep.subr.mxu0 0.0
    %416 = vmatpush1.msra.mxu0 0.0
    %417 = vmatprep.subr.mxu0 0.0
    %418 = vmatpush1.msra.mxu0 0.0
    %419 = vmatprep.subr.mxu0 0.0
    %420 = vmatpush1.msra.mxu0 0.0
    %421 = vmatprep.subr.mxu0 0.0
    %422 = vmatpush1.msra.mxu0 0.0
    %423 = vmatprep.subr.mxu0 0.0
    %424 = vmatpush1.msra.mxu0 0.0
    %425 = vmatprep.subr.mxu0 0.0
    %426 = vmatpush1.msra.mxu0 0.0
    %427 = vmatprep.subr.mxu0 0.0
    %428 = vmatpush1.msra.mxu0 0.0
    %429 = vmatprep.subr.mxu0 0.0
    %430 = vmatpush1.msra.mxu0 0.0
    %431 = vmatprep.subr.mxu0 0.0
    %432 = vmatpush1.msra.mxu0 0.0
    %433 = vmatprep.subr.mxu0 0.0
    %434 = vmatpush1.msra.mxu0 %v97
    %435 = vmatprep.subr.mxu0 0.0
    %436 = vmatpush1.msra.mxu0 %v96
    %437 = vmatprep.subr.mxu0 0.0
    %438 = vmatpush1.msra.mxu0 %v95
    %439 = vmatprep.subr.mxu0 0.0
    %440 = vmatpush1.msra.mxu0 %v94
    %441 = vmatprep.subr.mxu0 0.0
    %442 = vmatpush2.msra.mxu0 0.0
    %443 = vmatprep.subr.mxu0 0.0
    %444 = vmatpush2.msra.mxu0 0.0
    %445 = vmatprep.subr.mxu0 0.0
    %446 = vmatpush2.msra.mxu0 0.0
    %447 = vmatprep.subr.mxu0 0.0
    %448 = vmatpush2.msra.mxu0 0.0
    %449 = vmatprep.subr.mxu0 0.0
    %450 = vmatpush2.msra.mxu0 0.0
    %451 = vmatprep.subr.mxu0 0.0
    %452 = vmatpush2.msra.mxu0 0.0
    %453 = vmatprep.subr.mxu0 0.0
    %454 = vmatpush2.msra.mxu0 0.0
    %455 = vmatprep.subr.mxu0 0.0
    %456 = vmatpush2.msra.mxu0 0.0
    %457 = vmatprep.subr.mxu0 0.0
    %458 = vmatpush2.msra.mxu0 0.0
    %459 = vmatprep.subr.mxu0 0.0
    %460 = vmatpush2.msra.mxu0 0.0
    %461 = vmatprep.subr.mxu0 0.0
    %462 = vmatpush2.msra.mxu0 0.0
    %463 = vmatprep.subr.mxu0 0.0
    %464 = vmatpush2.msra.mxu0 0.0
    %465 = vmatprep.subr.mxu0 0.0
    %466 = vmatpush2.msra.mxu0 0.0
    %467 = vmatprep.subr.mxu0 0.0
    %468 = vmatpush2.msra.mxu0 0.0
    %469 = vmatprep.subr.mxu0 0.0
    %470 = vmatpush2.msra.mxu0 0.0
    %471 = vmatprep.subr.mxu0 0.0
    %472 = vmatpush2.msra.mxu0 0.0
    %473 = vmatprep.mubr.f32.mxu0 0.0
    %474 = vmatmul.mubr.f32.gmra.mxu0 %v407
    %v475 = vpop.f32.mrf.mxu0
    %v476 = vadd.f32 0.0, %v475
    %v477 = vpop.f32.mrf.mxu0
    %478 = vdwg.mxu0
    %v480 = vrot.slane %v476, 5
    %v481 = vrot.slane %v476, 6
    %v484 = vadd.f32 %v139, %v480
    %v485 = vadd.f32 %v140, %v481
    %v486 = vtanh.pop %v484
    %v487 = vtanh.pop %v485
    %vm488 = vcmask 257027
    %489 = vst.msk [vmem:[#allocation2] sm:$0x8] %vm488, %v486
    %490 = vst.msk [vmem:[#allocation2 + $0x8] sm:$0x8] %vm488, %v487
    %v493 = vrot.slane %v486, 3
    %v494 = vrot.slane %v487, 2
    %v495 = vsel %vm229, %v494, %v493
    %v496 = vsel %vm141, %v495, 0
    %498 = vmatprep.subr.mxu0 0.0
    %499 = vmatpush1.msra.mxu0 0.0
    %500 = vmatprep.subr.mxu0 0.0
    %501 = vmatpush1.msra.mxu0 0.0
    %502 = vmatprep.subr.mxu0 0.0
    %503 = vmatpush1.msra.mxu0 0.0
    %504 = vmatprep.subr.mxu0 0.0
    %505 = vmatpush1.msra.mxu0 0.0
    %506 = vmatprep.subr.mxu0 0.0
    %507 = vmatpush1.msra.mxu0 0.0
    %508 = vmatprep.subr.mxu0 0.0
    %509 = vmatpush1.msra.mxu0 0.0
    %510 = vmatprep.subr.mxu0 0.0
    %511 = vmatpush1.msra.mxu0 0.0
    %512 = vmatprep.subr.mxu0 0.0
    %513 = vmatpush1.msra.mxu0 0.0
    %514 = vmatprep.subr.mxu0 0.0
    %515 = vmatpush1.msra.mxu0 0.0
    %516 = vmatprep.subr.mxu0 0.0
    %517 = vmatpush1.msra.mxu0 0.0
    %518 = vmatprep.subr.mxu0 0.0
    %519 = vmatpush1.msra.mxu0 0.0
    %520 = vmatprep.subr.mxu0 0.0
    %521 = vmatpush1.msra.mxu0 0.0
    %522 = vmatprep.subr.mxu0 0.0
    %523 = vmatpush1.msra.mxu0 %v97
    %524 = vmatprep.subr.mxu0 0.0
    %525 = vmatpush1.msra.mxu0 %v96
    %526 = vmatprep.subr.mxu0 0.0
    %527 = vmatpush1.msra.mxu0 %v95
    %528 = vmatprep.subr.mxu0 0.0
    %529 = vmatpush1.msra.mxu0 %v94
    %530 = vmatprep.subr.mxu0 0.0
    %531 = vmatpush2.msra.mxu0 0.0
    %532 = vmatprep.subr.mxu0 0.0
    %533 = vmatpush2.msra.mxu0 0.0
    %534 = vmatprep.subr.mxu0 0.0
    %535 = vmatpush2.msra.mxu0 0.0
    %536 = vmatprep.subr.mxu0 0.0
    %537 = vmatpush2.msra.mxu0 0.0
    %538 = vmatprep.subr.mxu0 0.0
    %539 = vmatpush2.msra.mxu0 0.0
    %540 = vmatprep.subr.mxu0 0.0
    %541 = vmatpush2.msra.mxu0 0.0
    %542 = vmatprep.subr.mxu0 0.0
    %543 = vmatpush2.msra.mxu0 0.0
    %544 = vmatprep.subr.mxu0 0.0
    %545 = vmatpush2.msra.mxu0 0.0
    %546 = vmatprep.subr.mxu0 0.0
    %547 = vmatpush2.msra.mxu0 0.0
    %548 = vmatprep.subr.mxu0 0.0
    %549 = vmatpush2.msra.mxu0 0.0
    %550 = vmatprep.subr.mxu0 0.0
    %551 = vmatpush2.msra.mxu0 0.0
    %552 = vmatprep.subr.mxu0 0.0
    %553 = vmatpush2.msra.mxu0 0.0
    %554 = vmatprep.subr.mxu0 0.0
    %555 = vmatpush2.msra.mxu0 0.0
    %556 = vmatprep.subr.mxu0 0.0
    %557 = vmatpush2.msra.mxu0 0.0
    %558 = vmatprep.subr.mxu0 0.0
    %559 = vmatpush2.msra.mxu0 0.0
    %560 = vmatprep.subr.mxu0 0.0
    %561 = vmatpush2.msra.mxu0 0.0
    %562 = vmatprep.mubr.f32.mxu0 0.0
    %563 = vmatmul.mubr.f32.gmra.mxu0 %v496
    %v564 = vpop.f32.mrf.mxu0
    %v565 = vadd.f32 0.0, %v564
    %v566 = vpop.f32.mrf.mxu0
    %567 = vdwg.mxu0
    %v569 = vrot.slane %v565, 4
    %v570 = vrot.slane %v565, 5
    %v573 = vadd.f32 %v139, %v569
    %v574 = vadd.f32 %v140, %v570
    %v575 = vtanh.pop %v573
    %v576 = vtanh.pop %v574
    %vm577 = vcmask 258052
    %578 = vst.msk [vmem:[#allocation2] sm:$0x10] %vm577, %v575
    %579 = vst.msk [vmem:[#allocation2 + $0x8] sm:$0x10] %vm577, %v576
    %v582 = vrot.slane %v575, 4
    %v583 = vrot.slane %v576, 3
    %v584 = vsel %vm229, %v583, %v582
    %v585 = vsel %vm141, %v584, 0
    %587 = vmatprep.subr.mxu0 0.0
    %588 = vmatpush1.msra.mxu0 0.0
    %589 = vmatprep.subr.mxu0 0.0
    %590 = vmatpush1.msra.mxu0 0.0
    %591 = vmatprep.subr.mxu0 0.0
    %592 = vmatpush1.msra.mxu0 0.0
    %593 = vmatprep.subr.mxu0 0.0
    %594 = vmatpush1.msra.mxu0 0.0
    %595 = vmatprep.subr.mxu0 0.0
    %596 = vmatpush1.msra.mxu0 0.0
    %597 = vmatprep.subr.mxu0 0.0
    %598 = vmatpush1.msra.mxu0 0.0
    %599 = vmatprep.subr.mxu0 0.0
    %600 = vmatpush1.msra.mxu0 0.0
    %601 = vmatprep.subr.mxu0 0.0
    %602 = vmatpush1.msra.mxu0 0.0
    %603 = vmatprep.subr.mxu0 0.0
    %604 = vmatpush1.msra.mxu0 0.0
    %605 = vmatprep.subr.mxu0 0.0
    %606 = vmatpush1.msra.mxu0 0.0
    %607 = vmatprep.subr.mxu0 0.0
    %608 = vmatpush1.msra.mxu0 0.0
    %609 = vmatprep.subr.mxu0 0.0
    %610 = vmatpush1.msra.mxu0 0.0
    %611 = vmatprep.subr.mxu0 0.0
    %612 = vmatpush1.msra.mxu0 %v97
    %613 = vmatprep.subr.mxu0 0.0
    %614 = vmatpush1.msra.mxu0 %v96
    %615 = vmatprep.subr.mxu0 0.0
    %616 = vmatpush1.msra.mxu0 %v95
    %617 = vmatprep.subr.mxu0 0.0
    %618 = vmatpush1.msra.mxu0 %v94
    %619 = vmatprep.subr.mxu0 0.0
    %620 = vmatpush2.msra.mxu0 0.0
    %621 = vmatprep.subr.mxu0 0.0
    %622 = vmatpush2.msra.mxu0 0.0
    %623 = vmatprep.subr.mxu0 0.0
    %624 = vmatpush2.msra.mxu0 0.0
    %625 = vmatprep.subr.mxu0 0.0
    %626 = vmatpush2.msra.mxu0 0.0
    %627 = vmatprep.subr.mxu0 0.0
    %628 = vmatpush2.msra.mxu0 0.0
    %629 = vmatprep.subr.mxu0 0.0
    %630 = vmatpush2.msra.mxu0 0.0
    %631 = vmatprep.subr.mxu0 0.0
    %632 = vmatpush2.msra.mxu0 0.0
    %633 = vmatprep.subr.mxu0 0.0
    %634 = vmatpush2.msra.mxu0 0.0
    %635 = vmatprep.subr.mxu0 0.0
    %636 = vmatpush2.msra.mxu0 0.0
    %637 = vmatprep.subr.mxu0 0.0
    %638 = vmatpush2.msra.mxu0 0.0
    %639 = vmatprep.subr.mxu0 0.0
    %640 = vmatpush2.msra.mxu0 0.0
    %641 = vmatprep.subr.mxu0 0.0
    %642 = vmatpush2.msra.mxu0 0.0
    %643 = vmatprep.subr.mxu0 0.0
    %644 = vmatpush2.msra.mxu0 0.0
    %645 = vmatprep.subr.mxu0 0.0
    %646 = vmatpush2.msra.mxu0 0.0
    %647 = vmatprep.subr.mxu0 0.0
    %648 = vmatpush2.msra.mxu0 0.0
    %649 = vmatprep.subr.mxu0 0.0
    %650 = vmatpush2.msra.mxu0 0.0
    %651 = vmatprep.mubr.f32.mxu0 0.0
    %652 = vmatmul.mubr.f32.gmra.mxu0 %v585
    %v653 = vpop.f32.mrf.mxu0
    %v654 = vadd.f32 0.0, %v653
    %v655 = vpop.f32.mrf.mxu0
    %656 = vdwg.mxu0
    %v658 = vrot.slane %v654, 3
    %v659 = vrot.slane %v654, 4
    %v662 = vadd.f32 %v139, %v658
    %v663 = vadd.f32 %v140, %v659
    %v664 = vtanh.pop %v662
    %v665 = vtanh.pop %v663
    %vm666 = vcmask 259077
    %667 = vst.msk [vmem:[#allocation2] sm:$0x20] %vm666, %v664
    %668 = vst.msk [vmem:[#allocation2 + $0x8] sm:$0x20] %vm666, %v665
    %v671 = vrot.slane %v664, 5
    %v672 = vrot.slane %v665, 4
    %v673 = vsel %vm229, %v672, %v671
    %v674 = vsel %vm141, %v673, 0
    %676 = vmatprep.subr.mxu0 0.0
    %677 = vmatpush1.msra.mxu0 0.0
    %678 = vmatprep.subr.mxu0 0.0
    %679 = vmatpush1.msra.mxu0 0.0
    %680 = vmatprep.subr.mxu0 0.0
    %681 = vmatpush1.msra.mxu0 0.0
    %682 = vmatprep.subr.mxu0 0.0
    %683 = vmatpush1.msra.mxu0 0.0
    %684 = vmatprep.subr.mxu0 0.0
    %685 = vmatpush1.msra.mxu0 0.0
    %686 = vmatprep.subr.mxu0 0.0
    %687 = vmatpush1.msra.mxu0 0.0
    %688 = vmatprep.subr.mxu0 0.0
    %689 = vmatpush1.msra.mxu0 0.0
    %690 = vmatprep.subr.mxu0 0.0
    %691 = vmatpush1.msra.mxu0 0.0
    %692 = vmatprep.subr.mxu0 0.0
    %693 = vmatpush1.msra.mxu0 0.0
    %694 = vmatprep.subr.mxu0 0.0
    %695 = vmatpush1.msra.mxu0 0.0
    %696 = vmatprep.subr.mxu0 0.0
    %697 = vmatpush1.msra.mxu0 0.0
    %698 = vmatprep.subr.mxu0 0.0
    %699 = vmatpush1.msra.mxu0 0.0
    %700 = vmatprep.subr.mxu0 0.0
    %701 = vmatpush1.msra.mxu0 %v97
    %702 = vmatprep.subr.mxu0 0.0
    %703 = vmatpush1.msra.mxu0 %v96
    %704 = vmatprep.subr.mxu0 0.0
    %705 = vmatpush1.msra.mxu0 %v95
    %706 = vmatprep.subr.mxu0 0.0
    %707 = vmatpush1.msra.mxu0 %v94
    %708 = vmatprep.subr.mxu0 0.0
    %709 = vmatpush2.msra.mxu0 0.0
    %710 = vmatprep.subr.mxu0 0.0
    %711 = vmatpush2.msra.mxu0 0.0
    %712 = vmatprep.subr.mxu0 0.0
    %713 = vmatpush2.msra.mxu0 0.0
    %714 = vmatprep.subr.mxu0 0.0
    %715 = vmatpush2.msra.mxu0 0.0
    %716 = vmatprep.subr.mxu0 0.0
    %717 = vmatpush2.msra.mxu0 0.0
    %718 = vmatprep.subr.mxu0 0.0
    %719 = vmatpush2.msra.mxu0 0.0
    %720 = vmatprep.subr.mxu0 0.0
    %721 = vmatpush2.msra.mxu0 0.0
    %722 = vmatprep.subr.mxu0 0.0
    %723 = vmatpush2.msra.mxu0 0.0
    %724 = vmatprep.subr.mxu0 0.0
    %725 = vmatpush2.msra.mxu0 0.0
    %726 = vmatprep.subr.mxu0 0.0
    %727 = vmatpush2.msra.mxu0 0.0
    %728 = vmatprep.subr.mxu0 0.0
    %729 = vmatpush2.msra.mxu0 0.0
    %730 = vmatprep.subr.mxu0 0.0
    %731 = vmatpush2.msra.mxu0 0.0
    %732 = vmatprep.subr.mxu0 0.0
    %733 = vmatpush2.msra.mxu0 0.0
    %734 = vmatprep.subr.mxu0 0.0
    %735 = vmatpush2.msra.mxu0 0.0
    %736 = vmatprep.subr.mxu0 0.0
    %737 = vmatpush2.msra.mxu0 0.0
    %738 = vmatprep.subr.mxu0 0.0
    %739 = vmatpush2.msra.mxu0 0.0
    %740 = vmatprep.mubr.f32.mxu0 0.0
    %741 = vmatmul.mubr.f32.gmra.mxu0 %v674
    %v742 = vpop.f32.mrf.mxu0
    %v743 = vadd.f32 0.0, %v742
    %v744 = vpop.f32.mrf.mxu0
    %745 = vdwg.mxu0
    %v747 = vrot.slane %v743, 2
    %v748 = vrot.slane %v743, 3
    %v751 = vadd.f32 %v139, %v747
    %v752 = vadd.f32 %v140, %v748
    %v753 = vtanh.pop %v751
    %v754 = vtanh.pop %v752
    %vm755 = vcmask 260102
    %756 = vst.msk [vmem:[#allocation2] sm:$0x40] %vm755, %v753
    %757 = vst.msk [vmem:[#allocation2 + $0x8] sm:$0x40] %vm755, %v754
    %v760 = vrot.slane %v753, 6
    %v761 = vrot.slane %v754, 5
    %v762 = vsel %vm229, %v761, %v760
    %v763 = vsel %vm141, %v762, 0
    %765 = vmatprep.subr.mxu0 0.0
    %766 = vmatpush1.msra.mxu0 0.0
    %767 = vmatprep.subr.mxu0 0.0
    %768 = vmatpush1.msra.mxu0 0.0
    %769 = vmatprep.subr.mxu0 0.0
    %770 = vmatpush1.msra.mxu0 0.0
    %771 = vmatprep.subr.mxu0 0.0
    %772 = vmatpush1.msra.mxu0 0.0
    %773 = vmatprep.subr.mxu0 0.0
    %774 = vmatpush1.msra.mxu0 0.0
    %775 = vmatprep.subr.mxu0 0.0
    %776 = vmatpush1.msra.mxu0 0.0
    %777 = vmatprep.subr.mxu0 0.0
    %778 = vmatpush1.msra.mxu0 0.0
    %779 = vmatprep.subr.mxu0 0.0
    %780 = vmatpush1.msra.mxu0 0.0
    %781 = vmatprep.subr.mxu0 0.0
    %782 = vmatpush1.msra.mxu0 0.0
    %783 = vmatprep.subr.mxu0 0.0
    %784 = vmatpush1.msra.mxu0 0.0
    %785 = vmatprep.subr.mxu0 0.0
    %786 = vmatpush1.msra.mxu0 0.0
    %787 = vmatprep.subr.mxu0 0.0
    %788 = vmatpush1.msra.mxu0 0.0
    %789 = vmatprep.subr.mxu0 0.0
    %790 = vmatpush1.msra.mxu0 %v97
    %791 = vmatprep.subr.mxu0 0.0
    %792 = vmatpush1.msra.mxu0 %v96
    %793 = vmatprep.subr.mxu0 0.0
    %794 = vmatpush1.msra.mxu0 %v95
    %795 = vmatprep.subr.mxu0 0.0
    %796 = vmatpush1.msra.mxu0 %v94
    %797 = vmatprep.subr.mxu0 0.0
    %798 = vmatpush2.msra.mxu0 0.0
    %799 = vmatprep.subr.mxu0 0.0
    %800 = vmatpush2.msra.mxu0 0.0
    %801 = vmatprep.subr.mxu0 0.0
    %802 = vmatpush2.msra.mxu0 0.0
    %803 = vmatprep.subr.mxu0 0.0
    %804 = vmatpush2.msra.mxu0 0.0
    %805 = vmatprep.subr.mxu0 0.0
    %806 = vmatpush2.msra.mxu0 0.0
    %807 = vmatprep.subr.mxu0 0.0
    %808 = vmatpush2.msra.mxu0 0.0
    %809 = vmatprep.subr.mxu0 0.0
    %810 = vmatpush2.msra.mxu0 0.0
    %811 = vmatprep.subr.mxu0 0.0
    %812 = vmatpush2.msra.mxu0 0.0
    %813 = vmatprep.subr.mxu0 0.0
    %814 = vmatpush2.msra.mxu0 0.0
    %815 = vmatprep.subr.mxu0 0.0
    %816 = vmatpush2.msra.mxu0 0.0
    %817 = vmatprep.subr.mxu0 0.0
    %818 = vmatpush2.msra.mxu0 0.0
    %819 = vmatprep.subr.mxu0 0.0
    %820 = vmatpush2.msra.mxu0 0.0
    %821 = vmatprep.subr.mxu0 0.0
    %822 = vmatpush2.msra.mxu0 0.0
    %823 = vmatprep.subr.mxu0 0.0
    %824 = vmatpush2.msra.mxu0 0.0
    %825 = vmatprep.subr.mxu0 0.0
    %826 = vmatpush2.msra.mxu0 0.0
    %827 = vmatprep.subr.mxu0 0.0
    %828 = vmatpush2.msra.mxu0 0.0
    %829 = vmatprep.mubr.f32.mxu0 0.0
    %830 = vmatmul.mubr.f32.gmra.mxu0 %v763
    %v831 = vpop.f32.mrf.mxu0
    %v832 = vadd.f32 0.0, %v831
    %v833 = vpop.f32.mrf.mxu0
    %834 = vdwg.mxu0
    %v836 = vrot.slane %v832, 1
    %v837 = vrot.slane %v832, 2
    %v840 = vadd.f32 %v139, %v836
    %v841 = vadd.f32 %v140, %v837
    %v842 = vtanh.pop %v840
    %v843 = vtanh.pop %v841
    %vm844 = vcmask 261127
    %845 = vst.msk [vmem:[#allocation2] sm:$0x80] %vm844, %v842
    %846 = vst.msk [vmem:[#allocation2 + $0x8] sm:$0x80] %vm844, %v843
    %v847 = vld [vmem:[#allocation2] sm:$0xff]
    %v848 = vld [vmem:[#allocation2 + $0x8] sm:$0xff]
    %v849 = vld [vmem:[#allocation10] sm:$0xff]
    %v850 = vld [vmem:[#allocation10 + $0x8] sm:$0xff]
    %v851 = vld [vmem:[#allocation10 + $0x10] sm:$0xff]
    %v852 = vld [vmem:[#allocation10 + $0x18] sm:$0xff]
    %v853 = vld [vmem:[%s7] sm:$0x1]
    %v855 = vlaneseq
    %v856 = vshrl.u32 %v855, 7
    %v857 = vsub.s32 0, %v856
    %v858 = vrot.slane %v853, %v857
    %v861 = vsel %vm141, %v847, 0
    %v864 = vsel %vm141, %v848, 0
    %866 = vmatprep.subr.mxu0 0.0
    %867 = vmatpush1.msra.mxu0 0.0
    %868 = vmatprep.subr.mxu0 0.0
    %869 = vmatpush1.msra.mxu0 0.0
    %870 = vmatprep.subr.mxu0 0.0
    %871 = vmatpush1.msra.mxu0 0.0
    %872 = vmatprep.subr.mxu0 0.0
    %873 = vmatpush1.msra.mxu0 0.0
    %874 = vmatprep.subr.mxu0 0.0
    %875 = vmatpush1.msra.mxu0 0.0
    %876 = vmatprep.subr.mxu0 0.0
    %877 = vmatpush1.msra.mxu0 0.0
    %878 = vmatprep.subr.mxu0 0.0
    %879 = vmatpush1.msra.mxu0 0.0
    %880 = vmatprep.subr.mxu0 0.0
    %881 = vmatpush1.msra.mxu0 0.0
    %882 = vmatprep.subr.mxu0 0.0
    %883 = vmatpush1.msra.mxu0 0.0
    %884 = vmatprep.subr.mxu0 0.0
    %885 = vmatpush1.msra.mxu0 0.0
    %886 = vmatprep.subr.mxu0 0.0
    %887 = vmatpush1.msra.mxu0 0.0
    %888 = vmatprep.subr.mxu0 0.0
    %889 = vmatpush1.msra.mxu0 0.0
    %890 = vmatprep.subr.mxu0 0.0
    %891 = vmatpush1.msra.mxu0 %v852
    %892 = vmatprep.subr.mxu0 0.0
    %893 = vmatpush1.msra.mxu0 %v851
    %894 = vmatprep.subr.mxu0 0.0
    %895 = vmatpush1.msra.mxu0 %v850
    %896 = vmatprep.subr.mxu0 0.0
    %897 = vmatpush1.msra.mxu0 %v849
    %898 = vmatprep.subr.mxu0 0.0
    %899 = vmatpush2.msra.mxu0 0.0
    %900 = vmatprep.subr.mxu0 0.0
    %901 = vmatpush2.msra.mxu0 0.0
    %902 = vmatprep.subr.mxu0 0.0
    %903 = vmatpush2.msra.mxu0 0.0
    %904 = vmatprep.subr.mxu0 0.0
    %905 = vmatpush2.msra.mxu0 0.0
    %906 = vmatprep.subr.mxu0 0.0
    %907 = vmatpush2.msra.mxu0 0.0
    %908 = vmatprep.subr.mxu0 0.0
    %909 = vmatpush2.msra.mxu0 0.0
    %910 = vmatprep.subr.mxu0 0.0
    %911 = vmatpush2.msra.mxu0 0.0
    %912 = vmatprep.subr.mxu0 0.0
    %913 = vmatpush2.msra.mxu0 0.0
    %914 = vmatprep.subr.mxu0 0.0
    %915 = vmatpush2.msra.mxu0 0.0
    %916 = vmatprep.subr.mxu0 0.0
    %917 = vmatpush2.msra.mxu0 0.0
    %918 = vmatprep.subr.mxu0 0.0
    %919 = vmatpush2.msra.mxu0 0.0
    %920 = vmatprep.subr.mxu0 0.0
    %921 = vmatpush2.msra.mxu0 0.0
    %922 = vmatprep.subr.mxu0 0.0
    %923 = vmatpush2.msra.mxu0 0.0
    %924 = vmatprep.subr.mxu0 0.0
    %925 = vmatpush2.msra.mxu0 0.0
    %926 = vmatprep.subr.mxu0 0.0
    %927 = vmatpush2.msra.mxu0 0.0
    %928 = vmatprep.subr.mxu0 0.0
    %929 = vmatpush2.msra.mxu0 0.0
    %930 = vmatprep.mubr.f32.mxu0 0.0
    %931 = vmatmul.mubr.f32.gmra.mxu0 %v861
    %v932 = vpop.f32.mrf.mxu0
    %v933 = vadd.f32 %v858, %v932
    %v934 = vpop.f32.mrf.mxu0
    %935 = vmatprep.mubr.f32.mxu0 0.0
    %936 = vmatmul.mubr.f32.gmra.mxu0 %v864
    %v937 = vpop.f32.mrf.mxu0
    %v938 = vadd.f32 %v858, %v937
    %v939 = vpop.f32.mrf.mxu0
    %940 = vdwg.mxu0
    %941 = vst.msk [vmem:[#allocation2] sm:$0xff] %vm141, %v933
    %942 = vst.msk [vmem:[#allocation2 + $0x8] sm:$0xff] %vm141, %v938
    %v943 = vld [vmem:[#allocation2] sm:$0x1]
    %v944 = vld [vmem:[#allocation2 + $0x8] sm:$0x1]
    %v946 = vsel %vm141, %v107, 0
    %948 = vmatprep.subr.mxu0 0.0
    %949 = vmatpush1.msra.mxu0 0.0
    %950 = vmatprep.subr.mxu0 0.0
    %951 = vmatpush1.msra.mxu0 0.0
    %952 = vmatprep.subr.mxu0 0.0
    %953 = vmatpush1.msra.mxu0 0.0
    %954 = vmatprep.subr.mxu0 0.0
    %955 = vmatpush1.msra.mxu0 0.0
    %956 = vmatprep.subr.mxu0 0.0
    %957 = vmatpush1.msra.mxu0 0.0
    %958 = vmatprep.subr.mxu0 0.0
    %959 = vmatpush1.msra.mxu0 0.0
    %960 = vmatprep.subr.mxu0 0.0
    %961 = vmatpush1.msra.mxu0 0.0
    %962 = vmatprep.subr.mxu0 0.0
    %963 = vmatpush1.msra.mxu0 0.0
    %964 = vmatprep.subr.mxu0 0.0
    %965 = vmatpush1.msra.mxu0 0.0
    %966 = vmatprep.subr.mxu0 0.0
    %967 = vmatpush1.msra.mxu0 0.0
    %968 = vmatprep.subr.mxu0 0.0
    %969 = vmatpush1.msra.mxu0 0.0
    %970 = vmatprep.subr.mxu0 0.0
    %971 = vmatpush1.msra.mxu0 0.0
    %972 = vmatprep.subr.mxu0 0.0
    %973 = vmatpush1.msra.mxu0 %v101
    %974 = vmatprep.subr.mxu0 0.0
    %975 = vmatpush1.msra.mxu0 %v100
    %976 = vmatprep.subr.mxu0 0.0
    %977 = vmatpush1.msra.mxu0 %v99
    %978 = vmatprep.subr.mxu0 0.0
    %979 = vmatpush1.msra.mxu0 %v98
    %980 = vmatprep.subr.mxu0 0.0
    %981 = vmatpush2.msra.mxu0 0.0
    %982 = vmatprep.subr.mxu0 0.0
    %983 = vmatpush2.msra.mxu0 0.0
    %984 = vmatprep.subr.mxu0 0.0
    %985 = vmatpush2.msra.mxu0 0.0
    %986 = vmatprep.subr.mxu0 0.0
    %987 = vmatpush2.msra.mxu0 0.0
    %988 = vmatprep.subr.mxu0 0.0
    %989 = vmatpush2.msra.mxu0 0.0
    %990 = vmatprep.subr.mxu0 0.0
    %991 = vmatpush2.msra.mxu0 0.0
    %992 = vmatprep.subr.mxu0 0.0
    %993 = vmatpush2.msra.mxu0 0.0
    %994 = vmatprep.subr.mxu0 0.0
    %995 = vmatpush2.msra.mxu0 0.0
    %996 = vmatprep.subr.mxu0 0.0
    %997 = vmatpush2.msra.mxu0 0.0
    %998 = vmatprep.subr.mxu0 0.0
    %999 = vmatpush2.msra.mxu0 0.0
    %1000 = vmatprep.subr.mxu0 0.0
    %1001 = vmatpush2.msra.mxu0 0.0
    %1002 = vmatprep.subr.mxu0 0.0
    %1003 = vmatpush2.msra.mxu0 0.0
    %1004 = vmatprep.subr.mxu0 0.0
    %1005 = vmatpush2.msra.mxu0 0.0
    %1006 = vmatprep.subr.mxu0 0.0
    %1007 = vmatpush2.msra.mxu0 0.0
    %1008 = vmatprep.subr.mxu0 0.0
    %1009 = vmatpush2.msra.mxu0 0.0
    %1010 = vmatprep.subr.mxu0 0.0
    %1011 = vmatpush2.msra.mxu0 0.0
    %1012 = vmatprep.mubr.f32.mxu0 0.0
    %1013 = vmatmul.mubr.f32.gmra.mxu0 %v946
    %v1014 = vpop.f32.mrf.mxu0
    %v1015 = vadd.f32 0.0, %v1014
    %v1016 = vpop.f32.mrf.mxu0
    %1017 = vdwg.mxu0
    %v1019 = vrot.slane %v1015, 1
    %v1022 = vadd.f32 %v943, %v1015
    %v1023 = vadd.f32 %v944, %v1019
    %v1024 = vtanh.pop %v1022
    %v1025 = vtanh.pop %v1023
    %1026 = vst.msk [vmem:[#allocation3] sm:$0x1] %vm223, %v1024
    %1027 = vst.msk [vmem:[#allocation3 + $0x8] sm:$0x1] %vm223, %v1025
    %v1028 = vld [vmem:[#allocation2 + $0x1] sm:$0x1]
    %v1029 = vld [vmem:[#allocation2 + $0x9] sm:$0x1]
    %v1032 = vrot.slane %v1025, 7
    %v1033 = vsel %vm229, %v1032, %v1024
    %v1034 = vsel %vm141, %v1033, 0
    %1036 = vmatprep.subr.mxu0 0.0
    %1037 = vmatpush1.msra.mxu0 0.0
    %1038 = vmatprep.subr.mxu0 0.0
    %1039 = vmatpush1.msra.mxu0 0.0
    %1040 = vmatprep.subr.mxu0 0.0
    %1041 = vmatpush1.msra.mxu0 0.0
    %1042 = vmatprep.subr.mxu0 0.0
    %1043 = vmatpush1.msra.mxu0 0.0
    %1044 = vmatprep.subr.mxu0 0.0
    %1045 = vmatpush1.msra.mxu0 0.0
    %1046 = vmatprep.subr.mxu0 0.0
    %1047 = vmatpush1.msra.mxu0 0.0
    %1048 = vmatprep.subr.mxu0 0.0
    %1049 = vmatpush1.msra.mxu0 0.0
    %1050 = vmatprep.subr.mxu0 0.0
    %1051 = vmatpush1.msra.mxu0 0.0
    %1052 = vmatprep.subr.mxu0 0.0
    %1053 = vmatpush1.msra.mxu0 0.0
    %1054 = vmatprep.subr.mxu0 0.0
    %1055 = vmatpush1.msra.mxu0 0.0
    %1056 = vmatprep.subr.mxu0 0.0
    %1057 = vmatpush1.msra.mxu0 0.0
    %1058 = vmatprep.subr.mxu0 0.0
    %1059 = vmatpush1.msra.mxu0 0.0
    %1060 = vmatprep.subr.mxu0 0.0
    %1061 = vmatpush1.msra.mxu0 %v101
    %1062 = vmatprep.subr.mxu0 0.0
    %1063 = vmatpush1.msra.mxu0 %v100
    %1064 = vmatprep.subr.mxu0 0.0
    %1065 = vmatpush1.msra.mxu0 %v99
    %1066 = vmatprep.subr.mxu0 0.0
    %1067 = vmatpush1.msra.mxu0 %v98
    %1068 = vmatprep.subr.mxu0 0.0
    %1069 = vmatpush2.msra.mxu0 0.0
    %1070 = vmatprep.subr.mxu0 0.0
    %1071 = vmatpush2.msra.mxu0 0.0
    %1072 = vmatprep.subr.mxu0 0.0
    %1073 = vmatpush2.msra.mxu0 0.0
    %1074 = vmatprep.subr.mxu0 0.0
    %1075 = vmatpush2.msra.mxu0 0.0
    %1076 = vmatprep.subr.mxu0 0.0
    %1077 = vmatpush2.msra.mxu0 0.0
    %1078 = vmatprep.subr.mxu0 0.0
    %1079 = vmatpush2.msra.mxu0 0.0
    %1080 = vmatprep.subr.mxu0 0.0
    %1081 = vmatpush2.msra.mxu0 0.0
    %1082 = vmatprep.subr.mxu0 0.0
    %1083 = vmatpush2.msra.mxu0 0.0
    %1084 = vmatprep.subr.mxu0 0.0
    %1085 = vmatpush2.msra.mxu0 0.0
    %1086 = vmatprep.subr.mxu0 0.0
    %1087 = vmatpush2.msra.mxu0 0.0
    %1088 = vmatprep.subr.mxu0 0.0
    %1089 = vmatpush2.msra.mxu0 0.0
    %1090 = vmatprep.subr.mxu0 0.0
    %1091 = vmatpush2.msra.mxu0 0.0
    %1092 = vmatprep.subr.mxu0 0.0
    %1093 = vmatpush2.msra.mxu0 0.0
    %1094 = vmatprep.subr.mxu0 0.0
    %1095 = vmatpush2.msra.mxu0 0.0
    %1096 = vmatprep.subr.mxu0 0.0
    %1097 = vmatpush2.msra.mxu0 0.0
    %1098 = vmatprep.subr.mxu0 0.0
    %1099 = vmatpush2.msra.mxu0 0.0
    %1100 = vmatprep.mubr.f32.mxu0 0.0
    %1101 = vmatmul.mubr.f32.gmra.mxu0 %v1034
    %v1102 = vpop.f32.mrf.mxu0
    %v1103 = vadd.f32 0.0, %v1102
    %v1104 = vpop.f32.mrf.mxu0
    %1105 = vdwg.mxu0
    %v1107 = vrot.slane %v1103, 1
    %v1110 = vadd.f32 %v1028, %v1103
    %v1111 = vadd.f32 %v1029, %v1107
    %v1112 = vtanh.pop %v1110
    %v1113 = vtanh.pop %v1111
    %1114 = vst.msk [vmem:[#allocation3 + $0x1] sm:$0x1] %vm223, %v1112
    %1115 = vst.msk [vmem:[#allocation3 + $0x9] sm:$0x1] %vm223, %v1113
    %v1116 = vld [vmem:[#allocation2 + $0x2] sm:$0x1]
    %v1117 = vld [vmem:[#allocation2 + $0xa] sm:$0x1]
    %v1120 = vrot.slane %v1113, 7
    %v1121 = vsel %vm229, %v1120, %v1112
    %v1122 = vsel %vm141, %v1121, 0
    %1124 = vmatprep.subr.mxu0 0.0
    %1125 = vmatpush1.msra.mxu0 0.0
    %1126 = vmatprep.subr.mxu0 0.0
    %1127 = vmatpush1.msra.mxu0 0.0
    %1128 = vmatprep.subr.mxu0 0.0
    %1129 = vmatpush1.msra.mxu0 0.0
    %1130 = vmatprep.subr.mxu0 0.0
    %1131 = vmatpush1.msra.mxu0 0.0
    %1132 = vmatprep.subr.mxu0 0.0
    %1133 = vmatpush1.msra.mxu0 0.0
    %1134 = vmatprep.subr.mxu0 0.0
    %1135 = vmatpush1.msra.mxu0 0.0
    %1136 = vmatprep.subr.mxu0 0.0
    %1137 = vmatpush1.msra.mxu0 0.0
    %1138 = vmatprep.subr.mxu0 0.0
    %1139 = vmatpush1.msra.mxu0 0.0
    %1140 = vmatprep.subr.mxu0 0.0
    %1141 = vmatpush1.msra.mxu0 0.0
    %1142 = vmatprep.subr.mxu0 0.0
    %1143 = vmatpush1.msra.mxu0 0.0
    %1144 = vmatprep.subr.mxu0 0.0
    %1145 = vmatpush1.msra.mxu0 0.0
    %1146 = vmatprep.subr.mxu0 0.0
    %1147 = vmatpush1.msra.mxu0 0.0
    %1148 = vmatprep.subr.mxu0 0.0
    %1149 = vmatpush1.msra.mxu0 %v101
    %1150 = vmatprep.subr.mxu0 0.0
    %1151 = vmatpush1.msra.mxu0 %v100
    %1152 = vmatprep.subr.mxu0 0.0
    %1153 = vmatpush1.msra.mxu0 %v99
    %1154 = vmatprep.subr.mxu0 0.0
    %1155 = vmatpush1.msra.mxu0 %v98
    %1156 = vmatprep.subr.mxu0 0.0
    %1157 = vmatpush2.msra.mxu0 0.0
    %1158 = vmatprep.subr.mxu0 0.0
    %1159 = vmatpush2.msra.mxu0 0.0
    %1160 = vmatprep.subr.mxu0 0.0
    %1161 = vmatpush2.msra.mxu0 0.0
    %1162 = vmatprep.subr.mxu0 0.0
    %1163 = vmatpush2.msra.mxu0 0.0
    %1164 = vmatprep.subr.mxu0 0.0
    %1165 = vmatpush2.msra.mxu0 0.0
    %1166 = vmatprep.subr.mxu0 0.0
    %1167 = vmatpush2.msra.mxu0 0.0
    %1168 = vmatprep.subr.mxu0 0.0
    %1169 = vmatpush2.msra.mxu0 0.0
    %1170 = vmatprep.subr.mxu0 0.0
    %1171 = vmatpush2.msra.mxu0 0.0
    %1172 = vmatprep.subr.mxu0 0.0
    %1173 = vmatpush2.msra.mxu0 0.0
    %1174 = vmatprep.subr.mxu0 0.0
    %1175 = vmatpush2.msra.mxu0 0.0
    %1176 = vmatprep.subr.mxu0 0.0
    %1177 = vmatpush2.msra.mxu0 0.0
    %1178 = vmatprep.subr.mxu0 0.0
    %1179 = vmatpush2.msra.mxu0 0.0
    %1180 = vmatprep.subr.mxu0 0.0
    %1181 = vmatpush2.msra.mxu0 0.0
    %1182 = vmatprep.subr.mxu0 0.0
    %1183 = vmatpush2.msra.mxu0 0.0
    %1184 = vmatprep.subr.mxu0 0.0
    %1185 = vmatpush2.msra.mxu0 0.0
    %1186 = vmatprep.subr.mxu0 0.0
    %1187 = vmatpush2.msra.mxu0 0.0
    %1188 = vmatprep.mubr.f32.mxu0 0.0
    %1189 = vmatmul.mubr.f32.gmra.mxu0 %v1122
    %v1190 = vpop.f32.mrf.mxu0
    %v1191 = vadd.f32 0.0, %v1190
    %v1192 = vpop.f32.mrf.mxu0
    %1193 = vdwg.mxu0
    %v1195 = vrot.slane %v1191, 1
    %v1198 = vadd.f32 %v1116, %v1191
    %v1199 = vadd.f32 %v1117, %v1195
    %v1200 = vtanh.pop %v1198
    %v1201 = vtanh.pop %v1199
    %1202 = vst.msk [vmem:[#allocation3 + $0x2] sm:$0x1] %vm223, %v1200
    %1203 = vst.msk [vmem:[#allocation3 + $0xa] sm:$0x1] %vm223, %v1201
    %v1204 = vld [vmem:[#allocation2 + $0x3] sm:$0x1]
    %v1205 = vld [vmem:[#allocation2 + $0xb] sm:$0x1]
    %v1208 = vrot.slane %v1201, 7
    %v1209 = vsel %vm229, %v1208, %v1200
    %v1210 = vsel %vm141, %v1209, 0
    %1212 = vmatprep.subr.mxu0 0.0
    %1213 = vmatpush1.msra.mxu0 0.0
    %1214 = vmatprep.subr.mxu0 0.0
    %1215 = vmatpush1.msra.mxu0 0.0
    %1216 = vmatprep.subr.mxu0 0.0
    %1217 = vmatpush1.msra.mxu0 0.0
    %1218 = vmatprep.subr.mxu0 0.0
    %1219 = vmatpush1.msra.mxu0 0.0
    %1220 = vmatprep.subr.mxu0 0.0
    %1221 = vmatpush1.msra.mxu0 0.0
    %1222 = vmatprep.subr.mxu0 0.0
    %1223 = vmatpush1.msra.mxu0 0.0
    %1224 = vmatprep.subr.mxu0 0.0
    %1225 = vmatpush1.msra.mxu0 0.0
    %1226 = vmatprep.subr.mxu0 0.0
    %1227 = vmatpush1.msra.mxu0 0.0
    %1228 = vmatprep.subr.mxu0 0.0
    %1229 = vmatpush1.msra.mxu0 0.0
    %1230 = vmatprep.subr.mxu0 0.0
    %1231 = vmatpush1.msra.mxu0 0.0
    %1232 = vmatprep.subr.mxu0 0.0
    %1233 = vmatpush1.msra.mxu0 0.0
    %1234 = vmatprep.subr.mxu0 0.0
    %1235 = vmatpush1.msra.mxu0 0.0
    %1236 = vmatprep.subr.mxu0 0.0
    %1237 = vmatpush1.msra.mxu0 %v101
    %1238 = vmatprep.subr.mxu0 0.0
    %1239 = vmatpush1.msra.mxu0 %v100
    %1240 = vmatprep.subr.mxu0 0.0
    %1241 = vmatpush1.msra.mxu0 %v99
    %1242 = vmatprep.subr.mxu0 0.0
    %1243 = vmatpush1.msra.mxu0 %v98
    %1244 = vmatprep.subr.mxu0 0.0
    %1245 = vmatpush2.msra.mxu0 0.0
    %1246 = vmatprep.subr.mxu0 0.0
    %1247 = vmatpush2.msra.mxu0 0.0
    %1248 = vmatprep.subr.mxu0 0.0
    %1249 = vmatpush2.msra.mxu0 0.0
    %1250 = vmatprep.subr.mxu0 0.0
    %1251 = vmatpush2.msra.mxu0 0.0
    %1252 = vmatprep.subr.mxu0 0.0
    %1253 = vmatpush2.msra.mxu0 0.0
    %1254 = vmatprep.subr.mxu0 0.0
    %1255 = vmatpush2.msra.mxu0 0.0
    %1256 = vmatprep.subr.mxu0 0.0
    %1257 = vmatpush2.msra.mxu0 0.0
    %1258 = vmatprep.subr.mxu0 0.0
    %1259 = vmatpush2.msra.mxu0 0.0
    %1260 = vmatprep.subr.mxu0 0.0
    %1261 = vmatpush2.msra.mxu0 0.0
    %1262 = vmatprep.subr.mxu0 0.0
    %1263 = vmatpush2.msra.mxu0 0.0
    %1264 = vmatprep.subr.mxu0 0.0
    %1265 = vmatpush2.msra.mxu0 0.0
    %1266 = vmatprep.subr.mxu0 0.0
    %1267 = vmatpush2.msra.mxu0 0.0
    %1268 = vmatprep.subr.mxu0 0.0
    %1269 = vmatpush2.msra.mxu0 0.0
    %1270 = vmatprep.subr.mxu0 0.0
    %1271 = vmatpush2.msra.mxu0 0.0
    %1272 = vmatprep.subr.mxu0 0.0
    %1273 = vmatpush2.msra.mxu0 0.0
    %1274 = vmatprep.subr.mxu0 0.0
    %1275 = vmatpush2.msra.mxu0 0.0
    %1276 = vmatprep.mubr.f32.mxu0 0.0
    %1277 = vmatmul.mubr.f32.gmra.mxu0 %v1210
    %v1278 = vpop.f32.mrf.mxu0
    %v1279 = vadd.f32 0.0, %v1278
    %v1280 = vpop.f32.mrf.mxu0
    %1281 = vdwg.mxu0
    %v1283 = vrot.slane %v1279, 1
    %v1286 = vadd.f32 %v1204, %v1279
    %v1287 = vadd.f32 %v1205, %v1283
    %v1288 = vtanh.pop %v1286
    %v1289 = vtanh.pop %v1287
    %1290 = vst.msk [vmem:[#allocation3 + $0x3] sm:$0x1] %vm223, %v1288
    %1291 = vst.msk [vmem:[#allocation3 + $0xb] sm:$0x1] %vm223, %v1289
    %v1292 = vld [vmem:[#allocation2 + $0x4] sm:$0x1]
    %v1293 = vld [vmem:[#allocation2 + $0xc] sm:$0x1]
    %v1296 = vrot.slane %v1289, 7
    %v1297 = vsel %vm229, %v1296, %v1288
    %v1298 = vsel %vm141, %v1297, 0
    %1300 = vmatprep.subr.mxu0 0.0
    %1301 = vmatpush1.msra.mxu0 0.0
    %1302 = vmatprep.subr.mxu0 0.0
    %1303 = vmatpush1.msra.mxu0 0.0
    %1304 = vmatprep.subr.mxu0 0.0
    %1305 = vmatpush1.msra.mxu0 0.0
    %1306 = vmatprep.subr.mxu0 0.0
    %1307 = vmatpush1.msra.mxu0 0.0
    %1308 = vmatprep.subr.mxu0 0.0
    %1309 = vmatpush1.msra.mxu0 0.0
    %1310 = vmatprep.subr.mxu0 0.0
    %1311 = vmatpush1.msra.mxu0 0.0
    %1312 = vmatprep.subr.mxu0 0.0
    %1313 = vmatpush1.msra.mxu0 0.0
    %1314 = vmatprep.subr.mxu0 0.0
    %1315 = vmatpush1.msra.mxu0 0.0
    %1316 = vmatprep.subr.mxu0 0.0
    %1317 = vmatpush1.msra.mxu0 0.0
    %1318 = vmatprep.subr.mxu0 0.0
    %1319 = vmatpush1.msra.mxu0 0.0
    %1320 = vmatprep.subr.mxu0 0.0
    %1321 = vmatpush1.msra.mxu0 0.0
    %1322 = vmatprep.subr.mxu0 0.0
    %1323 = vmatpush1.msra.mxu0 0.0
    %1324 = vmatprep.subr.mxu0 0.0
    %1325 = vmatpush1.msra.mxu0 %v101
    %1326 = vmatprep.subr.mxu0 0.0
    %1327 = vmatpush1.msra.mxu0 %v100
    %1328 = vmatprep.subr.mxu0 0.0
    %1329 = vmatpush1.msra.mxu0 %v99
    %1330 = vmatprep.subr.mxu0 0.0
    %1331 = vmatpush1.msra.mxu0 %v98
    %1332 = vmatprep.subr.mxu0 0.0
    %1333 = vmatpush2.msra.mxu0 0.0
    %1334 = vmatprep.subr.mxu0 0.0
    %1335 = vmatpush2.msra.mxu0 0.0
    %1336 = vmatprep.subr.mxu0 0.0
    %1337 = vmatpush2.msra.mxu0 0.0
    %1338 = vmatprep.subr.mxu0 0.0
    %1339 = vmatpush2.msra.mxu0 0.0
    %1340 = vmatprep.subr.mxu0 0.0
    %1341 = vmatpush2.msra.mxu0 0.0
    %1342 = vmatprep.subr.mxu0 0.0
    %1343 = vmatpush2.msra.mxu0 0.0
    %1344 = vmatprep.subr.mxu0 0.0
    %1345 = vmatpush2.msra.mxu0 0.0
    %1346 = vmatprep.subr.mxu0 0.0
    %1347 = vmatpush2.msra.mxu0 0.0
    %1348 = vmatprep.subr.mxu0 0.0
    %1349 = vmatpush2.msra.mxu0 0.0
    %1350 = vmatprep.subr.mxu0 0.0
    %1351 = vmatpush2.msra.mxu0 0.0
    %1352 = vmatprep.subr.mxu0 0.0
    %1353 = vmatpush2.msra.mxu0 0.0
    %1354 = vmatprep.subr.mxu0 0.0
    %1355 = vmatpush2.msra.mxu0 0.0
    %1356 = vmatprep.subr.mxu0 0.0
    %1357 = vmatpush2.msra.mxu0 0.0
    %1358 = vmatprep.subr.mxu0 0.0
    %1359 = vmatpush2.msra.mxu0 0.0
    %1360 = vmatprep.subr.mxu0 0.0
    %1361 = vmatpush2.msra.mxu0 0.0
    %1362 = vmatprep.subr.mxu0 0.0
    %1363 = vmatpush2.msra.mxu0 0.0
    %1364 = vmatprep.mubr.f32.mxu0 0.0
    %1365 = vmatmul.mubr.f32.gmra.mxu0 %v1298
    %v1366 = vpop.f32.mrf.mxu0
    %v1367 = vadd.f32 0.0, %v1366
    %v1368 = vpop.f32.mrf.mxu0
    %1369 = vdwg.mxu0
    %v1371 = vrot.slane %v1367, 1
    %v1374 = vadd.f32 %v1292, %v1367
    %v1375 = vadd.f32 %v1293, %v1371
    %v1376 = vtanh.pop %v1374
    %v1377 = vtanh.pop %v1375
    %1378 = vst.msk [vmem:[#allocation3 + $0x4] sm:$0x1] %vm223, %v1376
    %1379 = vst.msk [vmem:[#allocation3 + $0xc] sm:$0x1] %vm223, %v1377
    %v1380 = vld [vmem:[#allocation2 + $0x5] sm:$0x1]
    %v1381 = vld [vmem:[#allocation2 + $0xd] sm:$0x1]
    %v1384 = vrot.slane %v1377, 7
    %v1385 = vsel %vm229, %v1384, %v1376
    %v1386 = vsel %vm141, %v1385, 0
    %1388 = vmatprep.subr.mxu0 0.0
    %1389 = vmatpush1.msra.mxu0 0.0
    %1390 = vmatprep.subr.mxu0 0.0
    %1391 = vmatpush1.msra.mxu0 0.0
    %1392 = vmatprep.subr.mxu0 0.0
    %1393 = vmatpush1.msra.mxu0 0.0
    %1394 = vmatprep.subr.mxu0 0.0
    %1395 = vmatpush1.msra.mxu0 0.0
    %1396 = vmatprep.subr.mxu0 0.0
    %1397 = vmatpush1.msra.mxu0 0.0
    %1398 = vmatprep.subr.mxu0 0.0
    %1399 = vmatpush1.msra.mxu0 0.0
    %1400 = vmatprep.subr.mxu0 0.0
    %1401 = vmatpush1.msra.mxu0 0.0
    %1402 = vmatprep.subr.mxu0 0.0
    %1403 = vmatpush1.msra.mxu0 0.0
    %1404 = vmatprep.subr.mxu0 0.0
    %1405 = vmatpush1.msra.mxu0 0.0
    %1406 = vmatprep.subr.mxu0 0.0
    %1407 = vmatpush1.msra.mxu0 0.0
    %1408 = vmatprep.subr.mxu0 0.0
    %1409 = vmatpush1.msra.mxu0 0.0
    %1410 = vmatprep.subr.mxu0 0.0
    %1411 = vmatpush1.msra.mxu0 0.0
    %1412 = vmatprep.subr.mxu0 0.0
    %1413 = vmatpush1.msra.mxu0 %v101
    %1414 = vmatprep.subr.mxu0 0.0
    %1415 = vmatpush1.msra.mxu0 %v100
    %1416 = vmatprep.subr.mxu0 0.0
    %1417 = vmatpush1.msra.mxu0 %v99
    %1418 = vmatprep.subr.mxu0 0.0
    %1419 = vmatpush1.msra.mxu0 %v98
    %1420 = vmatprep.subr.mxu0 0.0
    %1421 = vmatpush2.msra.mxu0 0.0
    %1422 = vmatprep.subr.mxu0 0.0
    %1423 = vmatpush2.msra.mxu0 0.0
    %1424 = vmatprep.subr.mxu0 0.0
    %1425 = vmatpush2.msra.mxu0 0.0
    %1426 = vmatprep.subr.mxu0 0.0
    %1427 = vmatpush2.msra.mxu0 0.0
    %1428 = vmatprep.subr.mxu0 0.0
    %1429 = vmatpush2.msra.mxu0 0.0
    %1430 = vmatprep.subr.mxu0 0.0
    %1431 = vmatpush2.msra.mxu0 0.0
    %1432 = vmatprep.subr.mxu0 0.0
    %1433 = vmatpush2.msra.mxu0 0.0
    %1434 = vmatprep.subr.mxu0 0.0
    %1435 = vmatpush2.msra.mxu0 0.0
    %1436 = vmatprep.subr.mxu0 0.0
    %1437 = vmatpush2.msra.mxu0 0.0
    %1438 = vmatprep.subr.mxu0 0.0
    %1439 = vmatpush2.msra.mxu0 0.0
    %1440 = vmatprep.subr.mxu0 0.0
    %1441 = vmatpush2.msra.mxu0 0.0
    %1442 = vmatprep.subr.mxu0 0.0
    %1443 = vmatpush2.msra.mxu0 0.0
    %1444 = vmatprep.subr.mxu0 0.0
    %1445 = vmatpush2.msra.mxu0 0.0
    %1446 = vmatprep.subr.mxu0 0.0
    %1447 = vmatpush2.msra.mxu0 0.0
    %1448 = vmatprep.subr.mxu0 0.0
    %1449 = vmatpush2.msra.mxu0 0.0
    %1450 = vmatprep.subr.mxu0 0.0
    %1451 = vmatpush2.msra.mxu0 0.0
    %1452 = vmatprep.mubr.f32.mxu0 0.0
    %1453 = vmatmul.mubr.f32.gmra.mxu0 %v1386
    %v1454 = vpop.f32.mrf.mxu0
    %v1455 = vadd.f32 0.0, %v1454
    %v1456 = vpop.f32.mrf.mxu0
    %1457 = vdwg.mxu0
    %v1459 = vrot.slane %v1455, 1
    %v1462 = vadd.f32 %v1380, %v1455
    %v1463 = vadd.f32 %v1381, %v1459
    %v1464 = vtanh.pop %v1462
    %v1465 = vtanh.pop %v1463
    %1466 = vst.msk [vmem:[#allocation3 + $0x5] sm:$0x1] %vm223, %v1464
    %1467 = vst.msk [vmem:[#allocation3 + $0xd] sm:$0x1] %vm223, %v1465
    %v1468 = vld [vmem:[#allocation2 + $0x6] sm:$0x1]
    %v1469 = vld [vmem:[#allocation2 + $0xe] sm:$0x1]
    %v1472 = vrot.slane %v1465, 7
    %v1473 = vsel %vm229, %v1472, %v1464
    %v1474 = vsel %vm141, %v1473, 0
    %1476 = vmatprep.subr.mxu0 0.0
    %1477 = vmatpush1.msra.mxu0 0.0
    %1478 = vmatprep.subr.mxu0 0.0
    %1479 = vmatpush1.msra.mxu0 0.0
    %1480 = vmatprep.subr.mxu0 0.0
    %1481 = vmatpush1.msra.mxu0 0.0
    %1482 = vmatprep.subr.mxu0 0.0
    %1483 = vmatpush1.msra.mxu0 0.0
    %1484 = vmatprep.subr.mxu0 0.0
    %1485 = vmatpush1.msra.mxu0 0.0
    %1486 = vmatprep.subr.mxu0 0.0
    %1487 = vmatpush1.msra.mxu0 0.0
    %1488 = vmatprep.subr.mxu0 0.0
    %1489 = vmatpush1.msra.mxu0 0.0
    %1490 = vmatprep.subr.mxu0 0.0
    %1491 = vmatpush1.msra.mxu0 0.0
    %1492 = vmatprep.subr.mxu0 0.0
    %1493 = vmatpush1.msra.mxu0 0.0
    %1494 = vmatprep.subr.mxu0 0.0
    %1495 = vmatpush1.msra.mxu0 0.0
    %1496 = vmatprep.subr.mxu0 0.0
    %1497 = vmatpush1.msra.mxu0 0.0
    %1498 = vmatprep.subr.mxu0 0.0
    %1499 = vmatpush1.msra.mxu0 0.0
    %1500 = vmatprep.subr.mxu0 0.0
    %1501 = vmatpush1.msra.mxu0 %v101
    %1502 = vmatprep.subr.mxu0 0.0
    %1503 = vmatpush1.msra.mxu0 %v100
    %1504 = vmatprep.subr.mxu0 0.0
    %1505 = vmatpush1.msra.mxu0 %v99
    %1506 = vmatprep.subr.mxu0 0.0
    %1507 = vmatpush1.msra.mxu0 %v98
    %1508 = vmatprep.subr.mxu0 0.0
    %1509 = vmatpush2.msra.mxu0 0.0
    %1510 = vmatprep.subr.mxu0 0.0
    %1511 = vmatpush2.msra.mxu0 0.0
    %1512 = vmatprep.subr.mxu0 0.0
    %1513 = vmatpush2.msra.mxu0 0.0
    %1514 = vmatprep.subr.mxu0 0.0
    %1515 = vmatpush2.msra.mxu0 0.0
    %1516 = vmatprep.subr.mxu0 0.0
    %1517 = vmatpush2.msra.mxu0 0.0
    %1518 = vmatprep.subr.mxu0 0.0
    %1519 = vmatpush2.msra.mxu0 0.0
    %1520 = vmatprep.subr.mxu0 0.0
    %1521 = vmatpush2.msra.mxu0 0.0
    %1522 = vmatprep.subr.mxu0 0.0
    %1523 = vmatpush2.msra.mxu0 0.0
    %1524 = vmatprep.subr.mxu0 0.0
    %1525 = vmatpush2.msra.mxu0 0.0
    %1526 = vmatprep.subr.mxu0 0.0
    %1527 = vmatpush2.msra.mxu0 0.0
    %1528 = vmatprep.subr.mxu0 0.0
    %1529 = vmatpush2.msra.mxu0 0.0
    %1530 = vmatprep.subr.mxu0 0.0
    %1531 = vmatpush2.msra.mxu0 0.0
    %1532 = vmatprep.subr.mxu0 0.0
    %1533 = vmatpush2.msra.mxu0 0.0
    %1534 = vmatprep.subr.mxu0 0.0
    %1535 = vmatpush2.msra.mxu0 0.0
    %1536 = vmatprep.subr.mxu0 0.0
    %1537 = vmatpush2.msra.mxu0 0.0
    %1538 = vmatprep.subr.mxu0 0.0
    %1539 = vmatpush2.msra.mxu0 0.0
    %1540 = vmatprep.mubr.f32.mxu0 0.0
    %1541 = vmatmul.mubr.f32.gmra.mxu0 %v1474
    %v1542 = vpop.f32.mrf.mxu0
    %v1543 = vadd.f32 0.0, %v1542
    %v1544 = vpop.f32.mrf.mxu0
    %1545 = vdwg.mxu0
    %v1547 = vrot.slane %v1543, 1
    %v1550 = vadd.f32 %v1468, %v1543
    %v1551 = vadd.f32 %v1469, %v1547
    %v1552 = vtanh.pop %v1550
    %v1553 = vtanh.pop %v1551
    %1554 = vst.msk [vmem:[#allocation3 + $0x6] sm:$0x1] %vm223, %v1552
    %1555 = vst.msk [vmem:[#allocation3 + $0xe] sm:$0x1] %vm223, %v1553
    %v1556 = vld [vmem:[#allocation2 + $0x7] sm:$0x1]
    %v1557 = vld [vmem:[#allocation2 + $0xf] sm:$0x1]
    %v1560 = vrot.slane %v1553, 7
    %v1561 = vsel %vm229, %v1560, %v1552
    %v1562 = vsel %vm141, %v1561, 0
    %1564 = vmatprep.subr.mxu0 0.0
    %1565 = vmatpush1.msra.mxu0 0.0
    %1566 = vmatprep.subr.mxu0 0.0
    %1567 = vmatpush1.msra.mxu0 0.0
    %1568 = vmatprep.subr.mxu0 0.0
    %1569 = vmatpush1.msra.mxu0 0.0
    %1570 = vmatprep.subr.mxu0 0.0
    %1571 = vmatpush1.msra.mxu0 0.0
    %1572 = vmatprep.subr.mxu0 0.0
    %1573 = vmatpush1.msra.mxu0 0.0
    %1574 = vmatprep.subr.mxu0 0.0
    %1575 = vmatpush1.msra.mxu0 0.0
    %1576 = vmatprep.subr.mxu0 0.0
    %1577 = vmatpush1.msra.mxu0 0.0
    %1578 = vmatprep.subr.mxu0 0.0
    %1579 = vmatpush1.msra.mxu0 0.0
    %1580 = vmatprep.subr.mxu0 0.0
    %1581 = vmatpush1.msra.mxu0 0.0
    %1582 = vmatprep.subr.mxu0 0.0
    %1583 = vmatpush1.msra.mxu0 0.0
    %1584 = vmatprep.subr.mxu0 0.0
    %1585 = vmatpush1.msra.mxu0 0.0
    %1586 = vmatprep.subr.mxu0 0.0
    %1587 = vmatpush1.msra.mxu0 0.0
    %1588 = vmatprep.subr.mxu0 0.0
    %1589 = vmatpush1.msra.mxu0 %v101
    %1590 = vmatprep.subr.mxu0 0.0
    %1591 = vmatpush1.msra.mxu0 %v100
    %1592 = vmatprep.subr.mxu0 0.0
    %1593 = vmatpush1.msra.mxu0 %v99
    %1594 = vmatprep.subr.mxu0 0.0
    %1595 = vmatpush1.msra.mxu0 %v98
    %1596 = vmatprep.subr.mxu0 0.0
    %1597 = vmatpush2.msra.mxu0 0.0
    %1598 = vmatprep.subr.mxu0 0.0
    %1599 = vmatpush2.msra.mxu0 0.0
    %1600 = vmatprep.subr.mxu0 0.0
    %1601 = vmatpush2.msra.mxu0 0.0
    %1602 = vmatprep.subr.mxu0 0.0
    %1603 = vmatpush2.msra.mxu0 0.0
    %1604 = vmatprep.subr.mxu0 0.0
    %1605 = vmatpush2.msra.mxu0 0.0
    %1606 = vmatprep.subr.mxu0 0.0
    %1607 = vmatpush2.msra.mxu0 0.0
    %1608 = vmatprep.subr.mxu0 0.0
    %1609 = vmatpush2.msra.mxu0 0.0
    %1610 = vmatprep.subr.mxu0 0.0
    %1611 = vmatpush2.msra.mxu0 0.0
    %1612 = vmatprep.subr.mxu0 0.0
    %1613 = vmatpush2.msra.mxu0 0.0
    %1614 = vmatprep.subr.mxu0 0.0
    %1615 = vmatpush2.msra.mxu0 0.0
    %1616 = vmatprep.subr.mxu0 0.0
    %1617 = vmatpush2.msra.mxu0 0.0
    %1618 = vmatprep.subr.mxu0 0.0
    %1619 = vmatpush2.msra.mxu0 0.0
    %1620 = vmatprep.subr.mxu0 0.0
    %1621 = vmatpush2.msra.mxu0 0.0
    %1622 = vmatprep.subr.mxu0 0.0
    %1623 = vmatpush2.msra.mxu0 0.0
    %1624 = vmatprep.subr.mxu0 0.0
    %1625 = vmatpush2.msra.mxu0 0.0
    %1626 = vmatprep.subr.mxu0 0.0
    %1627 = vmatpush2.msra.mxu0 0.0
    %1628 = vmatprep.mubr.f32.mxu0 0.0
    %1629 = vmatmul.mubr.f32.gmra.mxu0 %v1562
    %v1630 = vpop.f32.mrf.mxu0
    %v1631 = vadd.f32 0.0, %v1630
    %v1632 = vpop.f32.mrf.mxu0
    %1633 = vdwg.mxu0
    %v1635 = vrot.slane %v1631, 1
    %v1638 = vadd.f32 %v1556, %v1631
    %v1639 = vadd.f32 %v1557, %v1635
    %v1640 = vtanh.pop %v1638
    %v1641 = vtanh.pop %v1639
    %1642 = vst.msk [vmem:[#allocation3 + $0x7] sm:$0x1] %vm223, %v1640
    %1643 = vst.msk [vmem:[#allocation3 + $0xf] sm:$0x1] %vm223, %v1641
    %v1646 = vrot.slane %v843, 7
    %vm1649 = vcmask 244743
    %1650 = vst.msk [vmem:[#allocation14 - $0x7] sm:$0x80] %vm1649, %v842
    %vm1651 = vcmask 237568
    %1652 = vst.msk [vmem:[#allocation14 + $0x1] sm:$0x1] %vm1651, %v1646
    %v1655 = vrot.slane %v1641, 7
    %v1656 = vsel %vm229, %v1655, %v1640
    %s1658 = scalar_lea.vmem [#allocation14], 2
    %vm1659 = vcmask 238592
    %1660 = vst.msk [vmem:[%s1658] sm:$0x3] %vm1659, %v1656
    %v1661 = vld [vmem:[#allocation3] sm:$0xff]
    %v1662 = vld [vmem:[#allocation3 + $0x8] sm:$0xff]
    %v1663 = vld [vmem:[%s8] sm:$0x1]
    %v1665 = vlaneseq
    %v1666 = vshrl.u32 %v1665, 7
    %v1667 = vsub.s32 0, %v1666
    %v1668 = vrot.slane %v1663, %v1667
    %v1670 = vmul.f32 %v1661, %v1668
    %v1671 = vmul.f32 %v1662, %v1668
    %v1672 = vsel %vm141, %v1670, 0.0
    %1673 = vadd.xlane.f32.xlu0 %v1672
    %v1674 = vpop.xlane.xlu0 %1673
    %v1675 = vsel %vm141, %v1671, 0.0
    %1676 = vadd.xlane.f32.xlu0 %v1675
    %v1677 = vpop.xlane.xlu0 %1676
    %v1678 = vld [vmem:[#allocation4] sm:$0x1]
    %v1680 = vlaneseq
    %v1681 = vshrl.u32 %v1680, 7
    %v1682 = vsub.s32 0, %v1681
    %v1683 = vrot.slane %v1678, %v1682
    %1684 = vset.pattern.permute.xlu0 0
    %1685 = vperm.xlu0 %1684, %v1683
    %v1686 = vpop.permute.xlu0 %1685
    %v1688 = vadd.f32 %v1674, %v1686
    %v1689 = vadd.f32 %v1677, %v1686
    %v1692 = vlaneseq
    %v1693 = vand.u32 %v1692, 127
    %v1694 = vlaneseq
    %v1695 = vshrl.u32 %v1694, 7
    %v1696 = vsub.s32 %v1693, %v1695
    %v1697 = vrot.slane %v1688, %v1696
    %v1698 = vlaneseq
    %v1699 = vshrl.u32 %v1698, 7
    %v1700 = vsub.s32 %v1693, %v1699
    %v1701 = vrot.slane %v1689, %v1700
    %v1702 = vsel %vm229, %v1701, %v1697
    %vm1704 = vcmask 58368
    %1705 = vst.msk [vmem:[#allocation13] sm:$0x3] %vm1704, %v1702
    // Predicated region
    $region58: #{net_forward.1} parent=1 // pred_check
      _
    $region59: #{net_forward.1} parent=1 // pred_check_branch
      %1707 = sbr.rel (0) target = $region61
    $region60: #{net_forward.1} parent=1 // pred_region
      %s1709 = ssub.s32 32, 32
      %1710 = vsyncadd [#allocation7], %s1709
      %s1712 = sshll.u32 [#allocation13], 4
      %s1713 = int_to_ptr.vmem [resolvable:$true] %s1712
      %1715 = dma.vmem_to_hbm [thread:$0]  %s1713, 32, %s10, [#allocation7]
    $region61: #{net_forward.1} parent=1 // pred_fallthru
      _
    // Predicated region
    $region62: #{net_forward.1} parent=1 // pred_check
      _
    $region63: #{net_forward.1} parent=1 // pred_check_branch
      %1717 = sbr.rel (0) target = $region65
    $region64: #{net_forward.1} parent=1 // pred_region
      %s1719 = ssub.s32 64, 64
      %1720 = vsyncadd [#allocation15], %s1719
      %s1721 = sshll.u32 [#allocation14], 4
      %s1722 = int_to_ptr.vmem [resolvable:$true] %s1721
      %1727 = dma.vmem_to_hbm [thread:$0]  %s1722, 64, %s11, [#allocation15], 32, 32, 2
    $region65: #{net_forward.1} parent=1 // pred_fallthru
      _
    // Predicated region
    $region66: #{net_forward.1} parent=1 // pred_check
      _
    $region67: #{net_forward.1} parent=1 // pred_check_branch
      %1729 = sbr.rel (0) target = $region69
    $region68: #{net_forward.1} parent=1 // pred_region
      %1730 = dma.done [#allocation7], 32
    $region69: #{net_forward.1} parent=1 // pred_fallthru
      _
    // Predicated region
    $region70: #{net_forward.1} parent=1 // pred_check
      _
    $region71: #{net_forward.1} parent=1 // pred_check_branch
      %1732 = sbr.rel (0) target = $region73
    $region72: #{net_forward.1} parent=1 // pred_region
      %1733 = dma.done [#allocation15], 64
    $region73: #{net_forward.1} parent=1 // pred_fallthru
      _
    %1734 = vsyncpa [#allocation6], 1
    %1735 = vsyncpa [#allocation9], 1
    %1736 = vsyncpa [#allocation12], 1
    %1737 = vsyncpa [#allocation7], 1
    %1738 = vsyncpa [#allocation15], 1

</llo_original>
